<compile_context>
chip_gen: v5e
topology: v5e:2x2
jax: 0.10.0
libtpu: 0.0.40
codegen_flags: <defaults>
</compile_context>

<pallas_src>
import functools

import jax
import jax.numpy as jnp
from jax.experimental import pallas as pl
from jax.experimental.pallas import tpu as pltpu


_HP = 128        # hidden state padded to one full 128-lane vreg group
_OUT = 128       # lane-dense width of each decoded step in the output slab
_MAX_ROWS = 256  # max batch rows per grid step (big tiles amortize fixed cost)


def _cdiv(a, b):
    return -(-a // b)


def _round_up(a, b):
    return _cdiv(a, b) * b


def _place(dst, src, r0, c0):
    return dst.at[r0:r0 + src.shape[0], c0:c0 + src.shape[1]].set(src)


# -----------------------------------------------------------------------------
# Kernel
# -----------------------------------------------------------------------------
def _seq2seq_kernel(x_ref, w_enc_ref, w_dec_ref, w_out_ref, bias_ref, y_ref,
                    *, seq_len, tau, in_dim, hp, out_lanes):
    f32 = jnp.float32
    T, D, HP = seq_len, in_dim, hp
    BB = x_ref.shape[0] // T
    dot = lambda a, b: jnp.dot(a, b, preferred_element_type=f32)

    # ---- load packed weights once per grid step -----------------------------
    w_enc = w_enc_ref[...]                       # [D+HP, 3*HP]
    wi_e, wh_e = w_enc[:D, :], w_enc[D:, :]      # [D,3HP] input / [HP,3HP] hidden
    w_dec = w_dec_ref[...]                       # [2*HP, 4*HP]
    w_dec_in, w_dec_h = w_dec[:HP, :], w_dec[HP:, :]
    w_out = w_out_ref[...]                       # [HP, OUT]
    bias = bias_ref[...]                         # [8, 4*HP]

    # ---- hoisted bias broadcasts (never re-issued inside the recurrences) ---
    enc_hb = jnp.broadcast_to(bias[0:1, 0:3 * HP], (BB, 3 * HP))  # r|z|n_h side
    bin_eb = jnp.broadcast_to(bias[1:2, 0:HP], (BB, HP))          # enc n input bias
    dec_bb = jnp.broadcast_to(bias[2:3, :], (BB, 4 * HP))         # dec fused bias
    bout_b = jnp.broadcast_to(bias[3:4, 0:out_lanes], (BB, out_lanes))

    # ---- encoder input projections: ONE matmul for all T steps --------------
    xb = x_ref[...]                              # [T*BB, D], (t major, row minor)
    gi_all = dot(xb, wi_e)                       # [T*BB, 3*HP]

    # ---- encoder GRU recurrence (unrolled; one fused hidden matmul / step) --
    h = jnp.zeros((BB, HP), f32)
    for t in range(T):
        gi = gi_all[t * BB:(t + 1) * BB, :]      # sublane-aligned slice
        gh = dot(h, wh_e) + enc_hb               # slots: r | z | n_hidden
        r = jax.nn.sigmoid(gi[:, 0:HP] + gh[:, 0:HP])
        z = jax.nn.sigmoid(gi[:, HP:2 * HP] + gh[:, HP:2 * HP])
        n = jnp.tanh(gi[:, 2 * HP:3 * HP] + bin_eb + r * gh[:, 2 * HP:3 * HP])
        h = (1.0 - z) * n + z * h

    # ---- decoder GRU (unrolled; one fused gate matmul + one readout / step) -
    x_last = xb[(T - 1) * BB:, :]                # [BB, D] last observed step
    dec_in = None                                # previous output, [BB, OUT]
    ys = []
    for k in range(tau):
        if k == 0:
            # first decoder input is the raw last observation (D lanes)
            gd = dot(x_last, w_dec_in[:D, :]) + dot(h, w_dec_h) + dec_bb
        else:
            din = jnp.concatenate([dec_in, h], axis=-1)   # [BB, 2*HP], vreg-aligned
            gd = dot(din, w_dec) + dec_bb        # slots: r | z | n_in | n_hidden
        r = jax.nn.sigmoid(gd[:, 0:HP])
        z = jax.nn.sigmoid(gd[:, HP:2 * HP])
        n = jnp.tanh(gd[:, 2 * HP:3 * HP] + r * gd[:, 3 * HP:4 * HP])
        h = (1.0 - z) * n + z * h
        y = dot(h, w_out) + bout_b               # [BB, OUT], lanes [0:D] real
        ys.append(y)
        dec_in = y

    # single lane-dense writeback of the whole decoded block: [BB, tau*OUT]
    y_ref[...] = jnp.concatenate(ys, axis=-1).astype(y_ref.dtype)


# -----------------------------------------------------------------------------
# Param packing (done ONCE at init time, not per forward)
# -----------------------------------------------------------------------------
def pack_params(params, *, hidden):
    """Pack PyTorch-style fused GRU params into 4 lane/vreg-aligned slabs."""
    H, HP, OUT = hidden, _HP, _OUT
    D = params["wout"].shape[1]
    assert H <= HP and D <= HP and D <= OUT

    def split3(a):
        return a[..., :H], a[..., H:2 * H], a[..., 2 * H:]

    wir_e, wiz_e, win_e = split3(params["wih_e"])
    whr_e, whz_e, whn_e = split3(params["whh_e"])
    bir_e, biz_e, bin_e = split3(params["bih_e"])
    bhr_e, bhz_e, bhn_e = split3(params["bhh_e"])
    wir_d, wiz_d, win_d = split3(params["wih_d"])
    whr_d, whz_d, whn_d = split3(params["whh_d"])
    bir_d, biz_d, bin_d = split3(params["bih_d"])
    bhr_d, bhz_d, bhn_d = split3(params["bhh_d"])

    # Encoder: rows [0:D] input side, rows [D:D+HP] hidden side; each gate in
    # its own 128-lane slot.  Pad blocks are zeros -> math is exact.
    w_enc = jnp.zeros((D + HP, 3 * HP), jnp.float32)
    for g, (wi, wh) in enumerate(((wir_e, whr_e), (wiz_e, whz_e), (win_e, whn_e))):
        w_enc = _place(w_enc, wi, 0, g * HP)
        w_enc = _place(w_enc, wh, D, g * HP)

    # Decoder: rows [0:HP] input side (only first D rows real), rows [HP:2HP]
    # hidden side; 4 slots (r, z, n_input, n_hidden) so one fused matmul per
    # step still keeps the reset-gated hidden term separate.
    w_dec = jnp.zeros((2 * HP, 4 * HP), jnp.float32)
    w_dec = _place(w_dec, wir_d, 0, 0 * HP)
    w_dec = _place(w_dec, wiz_d, 0, 1 * HP)
    w_dec = _place(w_dec, win_d, 0, 2 * HP)
    w_dec = _place(w_dec, whr_d, HP, 0 * HP)
    w_dec = _place(w_dec, whz_d, HP, 1 * HP)
    w_dec = _place(w_dec, whn_d, HP, 3 * HP)

    # Readout, lane-padded to a full 128-lane output slot.
    w_out = jnp.zeros((HP, OUT), jnp.float32)
    w_out = _place(w_out, params["wout"], 0, 0)

    # Biases: one sublane-padded slab (rows: enc hidden-side, enc n-input,
    # decoder fused, readout; rest zero).
    bias = jnp.zeros((8, 4 * HP), jnp.float32)
    bias = _place(bias, bir_e + bhr_e, 0, 0 * HP)
    bias = _place(bias, biz_e + bhz_e, 0, 1 * HP)
    bias = _place(bias, bhn_e,         0, 2 * HP)
    bias = _place(bias, bin_e,         1, 0)
    bias = _place(bias, bir_d + bhr_d, 2, 0 * HP)
    bias = _place(bias, biz_d + bhz_d, 2, 1 * HP)
    bias = _place(bias, bin_d,         2, 2 * HP)
    bias = _place(bias, bhn_d,         2, 3 * HP)
    bias = _place(bias, params["bout"], 3, 0)

    return w_enc, w_dec, w_out, bias


# -----------------------------------------------------------------------------
# Forward wrapper
# -----------------------------------------------------------------------------
def seq2seq_forward(x, packed, *, tau):
    """x: [B, T, D] float32 -> [B, tau, D] float32."""
    B, T, D = x.shape
    w_enc, w_dec, w_out, bias = packed
    assert w_enc.shape[0] == D + _HP

    # Batch tiling: one tile covering the whole (padded) batch up to 256 rows;
    # larger batches split into near-equal tiles (on v7x >=2 tiles also lets
    # dimension_semantics=("parallel",) shard across both TensorCores).
    nb = _cdiv(B, _MAX_ROWS)
    BB = _round_up(_cdiv(B, nb), 8)
    Bp = nb * BB

    x_p = jnp.pad(x, ((0, Bp - B), (0, 0), (0, 0)))
    # tile-major, time-major-within-tile, batch-row-minor flat layout so the
    # kernel can run ONE input-projection matmul over all T*BB rows of a tile.
    x_flat = (x_p.reshape(nb, BB, T, D).transpose(0, 2, 1, 3)
              .reshape(nb * T * BB, D))

    kernel = functools.partial(_seq2seq_kernel, seq_len=T, tau=tau,
                               in_dim=D, hp=_HP, out_lanes=_OUT)

    y_flat = pl.pallas_call(
        kernel,
        out_shape=jax.ShapeDtypeStruct((Bp, tau * _OUT), jnp.float32),
        grid=(nb,),
        in_specs=[
            pl.BlockSpec((T * BB, D), lambda b: (b, 0)),
            pl.BlockSpec(w_enc.shape, lambda b: (0, 0)),
            pl.BlockSpec(w_dec.shape, lambda b: (0, 0)),
            pl.BlockSpec(w_out.shape, lambda b: (0, 0)),
            pl.BlockSpec(bias.shape, lambda b: (0, 0)),
        ],
        out_specs=pl.BlockSpec((BB, tau * _OUT), lambda b: (b, 0)),
        compiler_params=pltpu.CompilerParams(
            dimension_semantics=("parallel",)),
    )(x_flat, w_enc, w_dec, w_out, bias)

    # drop the lane padding (tau*D real lanes) and the batch padding
    return y_flat.reshape(Bp, tau, _OUT)[:B, :, :D]


# -----------------------------------------------------------------------------
# Init + pure-JAX reference
# -----------------------------------------------------------------------------
def init_params(key, D, hidden):
    """Deterministic init, PyTorch-style uniform(-1/sqrt(H), 1/sqrt(H))."""
    ks = jax.random.split(key, 11)
    s = 1.0 / jnp.sqrt(hidden).astype(jnp.float32)
    u = lambda k, shape: jax.random.uniform(k, shape, jnp.float32, -s, s)
    return {
        "wih_e": u(ks[0], (D, 3 * hidden)),
        "whh_e": u(ks[1], (hidden, 3 * hidden)),
        "bih_e": u(ks[2], (1, 3 * hidden)),
        "bhh_e": u(ks[3], (1, 3 * hidden)),
        "wih_d": u(ks[4], (D, 3 * hidden)),
        "whh_d": u(ks[5], (hidden, 3 * hidden)),
        "bih_d": u(ks[6], (1, 3 * hidden)),
        "bhh_d": u(ks[7], (1, 3 * hidden)),
        "wout":  u(ks[8], (hidden, D)),
        "bout":  u(ks[9], (1, D)),
    }


def reference_forward(x, params, *, tau, hidden):
    """Pure-JAX reference of the same model (fused PyTorch-style weights)."""
    B, T, D = x.shape

    def gru(xt, h, wih, whh, bih, bhh):
        gi = xt @ wih + bih
        gh = h @ whh + bhh
        i_r, i_z, i_n = gi[:, :hidden], gi[:, hidden:2 * hidden], gi[:, 2 * hidden:]
        h_r, h_z, h_n = gh[:, :hidden], gh[:, hidden:2 * hidden], gh[:, 2 * hidden:]
        r = jax.nn.sigmoid(i_r + h_r)
        z = jax.nn.sigmoid(i_z + h_z)
        n = jnp.tanh(i_n + r * h_n)
        return (1.0 - z) * n + z * h

    h = jnp.zeros((B, hidden), jnp.float32)
    for t in range(T):
        h = gru(x[:, t], h, params["wih_e"], params["whh_e"],
                params["bih_e"], params["bhh_e"])
    dec_in = x[:, -1]
    outs = []
    for _ in range(tau):
        h = gru(dec_in, h, params["wih_d"], params["whh_d"],
                params["bih_d"], params["bhh_d"])
        y = h @ params["wout"] + params["bout"]
        outs.append(y)
        dec_in = y
    return jnp.stack(outs, axis=1)


if __name__ == "__main__":
    # Small shapes implied by net.__init__: seq_len=T, hvs_len=D, pred_len=tau.
    B, T, D, TAU, HIDDEN = 4, 8, 8, 4, 32

    key = jax.random.PRNGKey(0)
    kx, kp = jax.random.split(key)
    x = jax.random.normal(kx, (B, T, D), jnp.float32)
    params = init_params(kp, D, HIDDEN)
    packed = pack_params(params, hidden=HIDDEN)   # one-time param packing

    fwd = jax.jit(functools.partial(seq2seq_forward, tau=TAU))
    y = jax.block_until_ready(fwd(x, packed))

    y_ref = reference_forward(x, params, tau=TAU, hidden=HIDDEN)
    assert y.shape == (B, TAU, D)
    assert jnp.allclose(y, y_ref, atol=1e-3, rtol=1e-3), "mismatch vs JAX reference"

    print("KERNEL_OK")
</pallas_src>

<mosaic_0001>
module attributes {stable_mosaic.version = 11 : i64} {
  func.func @_seq2seq_kernel(%arg0: i32, %arg1: memref<64x8xf32, #tpu.memory_space<vmem>>, %arg2: memref<136x384xf32, #tpu.memory_space<vmem>>, %arg3: memref<256x512xf32, #tpu.memory_space<vmem>>, %arg4: memref<128x128xf32, #tpu.memory_space<vmem>>, %arg5: memref<8x512xf32, #tpu.memory_space<vmem>>, %arg6: memref<8x512xf32, #tpu.memory_space<vmem>>) attributes {dimension_semantics = [#tpu.dimension_semantics<parallel>], iteration_bounds = array<i64: 1>, scalar_prefetch = 0 : i64, scratch_operands = 0 : i64, tpu.core_type = #tpu.core_type<tc>, window_params = [{transform_indices = @transform_0, window_bounds = array<i64: 64, 8>}, {pipeline_mode = #tpu.pipeline_mode<synchronous>, transform_indices = @transform_1, window_bounds = array<i64: 136, 384>}, {pipeline_mode = #tpu.pipeline_mode<synchronous>, transform_indices = @transform_2, window_bounds = array<i64: 256, 512>}, {pipeline_mode = #tpu.pipeline_mode<synchronous>, transform_indices = @transform_3, window_bounds = array<i64: 128, 128>}, {pipeline_mode = #tpu.pipeline_mode<synchronous>, transform_indices = @transform_4, window_bounds = array<i64: 8, 512>}, {transform_indices = @transform_5, window_bounds = array<i64: 8, 512>}]} {
    %c0 = arith.constant 0 : index
    %c0_0 = arith.constant 0 : index
    %0 = vector.load %arg2[%c0, %c0_0] : memref<136x384xf32, #tpu.memory_space<vmem>>, vector<136x384xf32>
    %1 = vector.extract_strided_slice %0 {offsets = [0, 0], sizes = [8, 384], strides = [1, 1]} : vector<136x384xf32> to vector<8x384xf32>
    %2 = vector.extract_strided_slice %0 {offsets = [8, 0], sizes = [128, 384], strides = [1, 1]} : vector<136x384xf32> to vector<128x384xf32>
    %c0_1 = arith.constant 0 : index
    %c0_2 = arith.constant 0 : index
    %3 = vector.load %arg3[%c0_1, %c0_2] : memref<256x512xf32, #tpu.memory_space<vmem>>, vector<256x512xf32>
    %4 = vector.extract_strided_slice %3 {offsets = [0, 0], sizes = [128, 512], strides = [1, 1]} : vector<256x512xf32> to vector<128x512xf32>
    %5 = vector.extract_strided_slice %3 {offsets = [128, 0], sizes = [128, 512], strides = [1, 1]} : vector<256x512xf32> to vector<128x512xf32>
    %c0_3 = arith.constant 0 : index
    %c0_4 = arith.constant 0 : index
    %6 = vector.load %arg4[%c0_3, %c0_4] : memref<128x128xf32, #tpu.memory_space<vmem>>, vector<128x128xf32>
    %c0_5 = arith.constant 0 : index
    %c0_6 = arith.constant 0 : index
    %7 = vector.load %arg5[%c0_5, %c0_6] : memref<8x512xf32, #tpu.memory_space<vmem>>, vector<8x512xf32>
    %8 = vector.extract_strided_slice %7 {offsets = [0, 0], sizes = [1, 384], strides = [1, 1]} : vector<8x512xf32> to vector<1x384xf32>
    %9 = vector.shape_cast %8 : vector<1x384xf32> to vector<1x384xf32>
    %10 = vector.broadcast %9 : vector<1x384xf32> to vector<8x384xf32>
    %11 = vector.extract_strided_slice %7 {offsets = [1, 0], sizes = [1, 128], strides = [1, 1]} : vector<8x512xf32> to vector<1x128xf32>
    %12 = vector.shape_cast %11 : vector<1x128xf32> to vector<1x128xf32>
    %13 = vector.broadcast %12 : vector<1x128xf32> to vector<8x128xf32>
    %14 = vector.extract_strided_slice %7 {offsets = [2, 0], sizes = [1, 512], strides = [1, 1]} : vector<8x512xf32> to vector<1x512xf32>
    %15 = vector.shape_cast %14 : vector<1x512xf32> to vector<1x512xf32>
    %16 = vector.broadcast %15 : vector<1x512xf32> to vector<8x512xf32>
    %17 = vector.extract_strided_slice %7 {offsets = [3, 0], sizes = [1, 128], strides = [1, 1]} : vector<8x512xf32> to vector<1x128xf32>
    %18 = vector.shape_cast %17 : vector<1x128xf32> to vector<1x128xf32>
    %19 = vector.broadcast %18 : vector<1x128xf32> to vector<8x128xf32>
    %c0_7 = arith.constant 0 : index
    %c0_8 = arith.constant 0 : index
    %20 = vector.load %arg1[%c0_7, %c0_8] : memref<64x8xf32, #tpu.memory_space<vmem>>, vector<64x8xf32>
    %cst = arith.constant dense<0.000000e+00> : vector<64x384xf32>
    %21 = tpu.matmul %20, %1, %cst {dimension_numbers = #tpu.dot_dimension_numbers<[1], [0], [0], [1], [0, 0, 1, 1], [], []>} : vector<64x8xf32>, vector<8x384xf32>, vector<64x384xf32> -> vector<64x384xf32>
    %cst_9 = arith.constant 0.000000e+00 : f32
    %22 = vector.broadcast %cst_9 : f32 to vector<8x128xf32>
    %23 = vector.extract_strided_slice %21 {offsets = [0, 0], sizes = [8, 384], strides = [1, 1]} : vector<64x384xf32> to vector<8x384xf32>
    %cst_10 = arith.constant dense<0.000000e+00> : vector<8x384xf32>
    %24 = tpu.matmul %22, %2, %cst_10 {dimension_numbers = #tpu.dot_dimension_numbers<[1], [0], [0], [1], [0, 0, 1, 1], [], []>} : vector<8x128xf32>, vector<128x384xf32>, vector<8x384xf32> -> vector<8x384xf32>
    %25 = arith.addf %24, %10 : vector<8x384xf32>
    %26 = vector.extract_strided_slice %23 {offsets = [0, 0], sizes = [8, 128], strides = [1, 1]} : vector<8x384xf32> to vector<8x128xf32>
    %27 = vector.extract_strided_slice %25 {offsets = [0, 0], sizes = [8, 128], strides = [1, 1]} : vector<8x384xf32> to vector<8x128xf32>
    %28 = arith.addf %26, %27 : vector<8x128xf32>
    %29 = arith.negf %28 : vector<8x128xf32>
    %30 = math.exp %29 : vector<8x128xf32>
    %cst_11 = arith.constant 1.000000e+00 : f32
    %31 = vector.broadcast %cst_11 : f32 to vector<8x128xf32>
    %32 = arith.addf %31, %30 : vector<8x128xf32>
    %33 = arith.divf %31, %32 : vector<8x128xf32>
    %34 = vector.extract_strided_slice %23 {offsets = [0, 128], sizes = [8, 128], strides = [1, 1]} : vector<8x384xf32> to vector<8x128xf32>
    %35 = vector.extract_strided_slice %25 {offsets = [0, 128], sizes = [8, 128], strides = [1, 1]} : vector<8x384xf32> to vector<8x128xf32>
    %36 = arith.addf %34, %35 : vector<8x128xf32>
    %37 = arith.negf %36 : vector<8x128xf32>
    %38 = math.exp %37 : vector<8x128xf32>
    %cst_12 = arith.constant 1.000000e+00 : f32
    %39 = vector.broadcast %cst_12 : f32 to vector<8x128xf32>
    %40 = arith.addf %39, %38 : vector<8x128xf32>
    %41 = arith.divf %39, %40 : vector<8x128xf32>
    %42 = vector.extract_strided_slice %23 {offsets = [0, 256], sizes = [8, 128], strides = [1, 1]} : vector<8x384xf32> to vector<8x128xf32>
    %43 = arith.addf %42, %13 : vector<8x128xf32>
    %44 = vector.extract_strided_slice %25 {offsets = [0, 256], sizes = [8, 128], strides = [1, 1]} : vector<8x384xf32> to vector<8x128xf32>
    %45 = arith.mulf %33, %44 : vector<8x128xf32>
    %46 = arith.addf %43, %45 : vector<8x128xf32>
    %47 = math.tanh %46 : vector<8x128xf32>
    %cst_13 = arith.constant 1.000000e+00 : f32
    %48 = vector.broadcast %cst_13 : f32 to vector<8x128xf32>
    %49 = arith.subf %48, %41 : vector<8x128xf32>
    %50 = arith.mulf %49, %47 : vector<8x128xf32>
    %51 = arith.mulf %41, %22 : vector<8x128xf32>
    %52 = arith.addf %50, %51 : vector<8x128xf32>
    %53 = vector.extract_strided_slice %21 {offsets = [8, 0], sizes = [8, 384], strides = [1, 1]} : vector<64x384xf32> to vector<8x384xf32>
    %cst_14 = arith.constant dense<0.000000e+00> : vector<8x384xf32>
    %54 = tpu.matmul %52, %2, %cst_14 {dimension_numbers = #tpu.dot_dimension_numbers<[1], [0], [0], [1], [0, 0, 1, 1], [], []>} : vector<8x128xf32>, vector<128x384xf32>, vector<8x384xf32> -> vector<8x384xf32>
    %55 = arith.addf %54, %10 : vector<8x384xf32>
    %56 = vector.extract_strided_slice %53 {offsets = [0, 0], sizes = [8, 128], strides = [1, 1]} : vector<8x384xf32> to vector<8x128xf32>
    %57 = vector.extract_strided_slice %55 {offsets = [0, 0], sizes = [8, 128], strides = [1, 1]} : vector<8x384xf32> to vector<8x128xf32>
    %58 = arith.addf %56, %57 : vector<8x128xf32>
    %59 = arith.negf %58 : vector<8x128xf32>
    %60 = math.exp %59 : vector<8x128xf32>
    %cst_15 = arith.constant 1.000000e+00 : f32
    %61 = vector.broadcast %cst_15 : f32 to vector<8x128xf32>
    %62 = arith.addf %61, %60 : vector<8x128xf32>
    %63 = arith.divf %61, %62 : vector<8x128xf32>
    %64 = vector.extract_strided_slice %53 {offsets = [0, 128], sizes = [8, 128], strides = [1, 1]} : vector<8x384xf32> to vector<8x128xf32>
    %65 = vector.extract_strided_slice %55 {offsets = [0, 128], sizes = [8, 128], strides = [1, 1]} : vector<8x384xf32> to vector<8x128xf32>
    %66 = arith.addf %64, %65 : vector<8x128xf32>
    %67 = arith.negf %66 : vector<8x128xf32>
    %68 = math.exp %67 : vector<8x128xf32>
    %cst_16 = arith.constant 1.000000e+00 : f32
    %69 = vector.broadcast %cst_16 : f32 to vector<8x128xf32>
    %70 = arith.addf %69, %68 : vector<8x128xf32>
    %71 = arith.divf %69, %70 : vector<8x128xf32>
    %72 = vector.extract_strided_slice %53 {offsets = [0, 256], sizes = [8, 128], strides = [1, 1]} : vector<8x384xf32> to vector<8x128xf32>
    %73 = arith.addf %72, %13 : vector<8x128xf32>
    %74 = vector.extract_strided_slice %55 {offsets = [0, 256], sizes = [8, 128], strides = [1, 1]} : vector<8x384xf32> to vector<8x128xf32>
    %75 = arith.mulf %63, %74 : vector<8x128xf32>
    %76 = arith.addf %73, %75 : vector<8x128xf32>
    %77 = math.tanh %76 : vector<8x128xf32>
    %cst_17 = arith.constant 1.000000e+00 : f32
    %78 = vector.broadcast %cst_17 : f32 to vector<8x128xf32>
    %79 = arith.subf %78, %71 : vector<8x128xf32>
    %80 = arith.mulf %79, %77 : vector<8x128xf32>
    %81 = arith.mulf %71, %52 : vector<8x128xf32>
    %82 = arith.addf %80, %81 : vector<8x128xf32>
    %83 = vector.extract_strided_slice %21 {offsets = [16, 0], sizes = [8, 384], strides = [1, 1]} : vector<64x384xf32> to vector<8x384xf32>
    %cst_18 = arith.constant dense<0.000000e+00> : vector<8x384xf32>
    %84 = tpu.matmul %82, %2, %cst_18 {dimension_numbers = #tpu.dot_dimension_numbers<[1], [0], [0], [1], [0, 0, 1, 1], [], []>} : vector<8x128xf32>, vector<128x384xf32>, vector<8x384xf32> -> vector<8x384xf32>
    %85 = arith.addf %84, %10 : vector<8x384xf32>
    %86 = vector.extract_strided_slice %83 {offsets = [0, 0], sizes = [8, 128], strides = [1, 1]} : vector<8x384xf32> to vector<8x128xf32>
    %87 = vector.extract_strided_slice %85 {offsets = [0, 0], sizes = [8, 128], strides = [1, 1]} : vector<8x384xf32> to vector<8x128xf32>
    %88 = arith.addf %86, %87 : vector<8x128xf32>
    %89 = arith.negf %88 : vector<8x128xf32>
    %90 = math.exp %89 : vector<8x128xf32>
    %cst_19 = arith.constant 1.000000e+00 : f32
    %91 = vector.broadcast %cst_19 : f32 to vector<8x128xf32>
    %92 = arith.addf %91, %90 : vector<8x128xf32>
    %93 = arith.divf %91, %92 : vector<8x128xf32>
    %94 = vector.extract_strided_slice %83 {offsets = [0, 128], sizes = [8, 128], strides = [1, 1]} : vector<8x384xf32> to vector<8x128xf32>
    %95 = vector.extract_strided_slice %85 {offsets = [0, 128], sizes = [8, 128], strides = [1, 1]} : vector<8x384xf32> to vector<8x128xf32>
    %96 = arith.addf %94, %95 : vector<8x128xf32>
    %97 = arith.negf %96 : vector<8x128xf32>
    %98 = math.exp %97 : vector<8x128xf32>
    %cst_20 = arith.constant 1.000000e+00 : f32
    %99 = vector.broadcast %cst_20 : f32 to vector<8x128xf32>
    %100 = arith.addf %99, %98 : vector<8x128xf32>
    %101 = arith.divf %99, %100 : vector<8x128xf32>
    %102 = vector.extract_strided_slice %83 {offsets = [0, 256], sizes = [8, 128], strides = [1, 1]} : vector<8x384xf32> to vector<8x128xf32>
    %103 = arith.addf %102, %13 : vector<8x128xf32>
    %104 = vector.extract_strided_slice %85 {offsets = [0, 256], sizes = [8, 128], strides = [1, 1]} : vector<8x384xf32> to vector<8x128xf32>
    %105 = arith.mulf %93, %104 : vector<8x128xf32>
    %106 = arith.addf %103, %105 : vector<8x128xf32>
    %107 = math.tanh %106 : vector<8x128xf32>
    %cst_21 = arith.constant 1.000000e+00 : f32
    %108 = vector.broadcast %cst_21 : f32 to vector<8x128xf32>
    %109 = arith.subf %108, %101 : vector<8x128xf32>
    %110 = arith.mulf %109, %107 : vector<8x128xf32>
    %111 = arith.mulf %101, %82 : vector<8x128xf32>
    %112 = arith.addf %110, %111 : vector<8x128xf32>
    %113 = vector.extract_strided_slice %21 {offsets = [24, 0], sizes = [8, 384], strides = [1, 1]} : vector<64x384xf32> to vector<8x384xf32>
    %cst_22 = arith.constant dense<0.000000e+00> : vector<8x384xf32>
    %114 = tpu.matmul %112, %2, %cst_22 {dimension_numbers = #tpu.dot_dimension_numbers<[1], [0], [0], [1], [0, 0, 1, 1], [], []>} : vector<8x128xf32>, vector<128x384xf32>, vector<8x384xf32> -> vector<8x384xf32>
    %115 = arith.addf %114, %10 : vector<8x384xf32>
    %116 = vector.extract_strided_slice %113 {offsets = [0, 0], sizes = [8, 128], strides = [1, 1]} : vector<8x384xf32> to vector<8x128xf32>
    %117 = vector.extract_strided_slice %115 {offsets = [0, 0], sizes = [8, 128], strides = [1, 1]} : vector<8x384xf32> to vector<8x128xf32>
    %118 = arith.addf %116, %117 : vector<8x128xf32>
    %119 = arith.negf %118 : vector<8x128xf32>
    %120 = math.exp %119 : vector<8x128xf32>
    %cst_23 = arith.constant 1.000000e+00 : f32
    %121 = vector.broadcast %cst_23 : f32 to vector<8x128xf32>
    %122 = arith.addf %121, %120 : vector<8x128xf32>
    %123 = arith.divf %121, %122 : vector<8x128xf32>
    %124 = vector.extract_strided_slice %113 {offsets = [0, 128], sizes = [8, 128], strides = [1, 1]} : vector<8x384xf32> to vector<8x128xf32>
    %125 = vector.extract_strided_slice %115 {offsets = [0, 128], sizes = [8, 128], strides = [1, 1]} : vector<8x384xf32> to vector<8x128xf32>
    %126 = arith.addf %124, %125 : vector<8x128xf32>
    %127 = arith.negf %126 : vector<8x128xf32>
    %128 = math.exp %127 : vector<8x128xf32>
    %cst_24 = arith.constant 1.000000e+00 : f32
    %129 = vector.broadcast %cst_24 : f32 to vector<8x128xf32>
    %130 = arith.addf %129, %128 : vector<8x128xf32>
    %131 = arith.divf %129, %130 : vector<8x128xf32>
    %132 = vector.extract_strided_slice %113 {offsets = [0, 256], sizes = [8, 128], strides = [1, 1]} : vector<8x384xf32> to vector<8x128xf32>
    %133 = arith.addf %132, %13 : vector<8x128xf32>
    %134 = vector.extract_strided_slice %115 {offsets = [0, 256], sizes = [8, 128], strides = [1, 1]} : vector<8x384xf32> to vector<8x128xf32>
    %135 = arith.mulf %123, %134 : vector<8x128xf32>
    %136 = arith.addf %133, %135 : vector<8x128xf32>
    %137 = math.tanh %136 : vector<8x128xf32>
    %cst_25 = arith.constant 1.000000e+00 : f32
    %138 = vector.broadcast %cst_25 : f32 to vector<8x128xf32>
    %139 = arith.subf %138, %131 : vector<8x128xf32>
    %140 = arith.mulf %139, %137 : vector<8x128xf32>
    %141 = arith.mulf %131, %112 : vector<8x128xf32>
    %142 = arith.addf %140, %141 : vector<8x128xf32>
    %143 = vector.extract_strided_slice %21 {offsets = [32, 0], sizes = [8, 384], strides = [1, 1]} : vector<64x384xf32> to vector<8x384xf32>
    %cst_26 = arith.constant dense<0.000000e+00> : vector<8x384xf32>
    %144 = tpu.matmul %142, %2, %cst_26 {dimension_numbers = #tpu.dot_dimension_numbers<[1], [0], [0], [1], [0, 0, 1, 1], [], []>} : vector<8x128xf32>, vector<128x384xf32>, vector<8x384xf32> -> vector<8x384xf32>
    %145 = arith.addf %144, %10 : vector<8x384xf32>
    %146 = vector.extract_strided_slice %143 {offsets = [0, 0], sizes = [8, 128], strides = [1, 1]} : vector<8x384xf32> to vector<8x128xf32>
    %147 = vector.extract_strided_slice %145 {offsets = [0, 0], sizes = [8, 128], strides = [1, 1]} : vector<8x384xf32> to vector<8x128xf32>
    %148 = arith.addf %146, %147 : vector<8x128xf32>
    %149 = arith.negf %148 : vector<8x128xf32>
    %150 = math.exp %149 : vector<8x128xf32>
    %cst_27 = arith.constant 1.000000e+00 : f32
    %151 = vector.broadcast %cst_27 : f32 to vector<8x128xf32>
    %152 = arith.addf %151, %150 : vector<8x128xf32>
    %153 = arith.divf %151, %152 : vector<8x128xf32>
    %154 = vector.extract_strided_slice %143 {offsets = [0, 128], sizes = [8, 128], strides = [1, 1]} : vector<8x384xf32> to vector<8x128xf32>
    %155 = vector.extract_strided_slice %145 {offsets = [0, 128], sizes = [8, 128], strides = [1, 1]} : vector<8x384xf32> to vector<8x128xf32>
    %156 = arith.addf %154, %155 : vector<8x128xf32>
    %157 = arith.negf %156 : vector<8x128xf32>
    %158 = math.exp %157 : vector<8x128xf32>
    %cst_28 = arith.constant 1.000000e+00 : f32
    %159 = vector.broadcast %cst_28 : f32 to vector<8x128xf32>
    %160 = arith.addf %159, %158 : vector<8x128xf32>
    %161 = arith.divf %159, %160 : vector<8x128xf32>
    %162 = vector.extract_strided_slice %143 {offsets = [0, 256], sizes = [8, 128], strides = [1, 1]} : vector<8x384xf32> to vector<8x128xf32>
    %163 = arith.addf %162, %13 : vector<8x128xf32>
    %164 = vector.extract_strided_slice %145 {offsets = [0, 256], sizes = [8, 128], strides = [1, 1]} : vector<8x384xf32> to vector<8x128xf32>
    %165 = arith.mulf %153, %164 : vector<8x128xf32>
    %166 = arith.addf %163, %165 : vector<8x128xf32>
    %167 = math.tanh %166 : vector<8x128xf32>
    %cst_29 = arith.constant 1.000000e+00 : f32
    %168 = vector.broadcast %cst_29 : f32 to vector<8x128xf32>
    %169 = arith.subf %168, %161 : vector<8x128xf32>
    %170 = arith.mulf %169, %167 : vector<8x128xf32>
    %171 = arith.mulf %161, %142 : vector<8x128xf32>
    %172 = arith.addf %170, %171 : vector<8x128xf32>
    %173 = vector.extract_strided_slice %21 {offsets = [40, 0], sizes = [8, 384], strides = [1, 1]} : vector<64x384xf32> to vector<8x384xf32>
    %cst_30 = arith.constant dense<0.000000e+00> : vector<8x384xf32>
    %174 = tpu.matmul %172, %2, %cst_30 {dimension_numbers = #tpu.dot_dimension_numbers<[1], [0], [0], [1], [0, 0, 1, 1], [], []>} : vector<8x128xf32>, vector<128x384xf32>, vector<8x384xf32> -> vector<8x384xf32>
    %175 = arith.addf %174, %10 : vector<8x384xf32>
    %176 = vector.extract_strided_slice %173 {offsets = [0, 0], sizes = [8, 128], strides = [1, 1]} : vector<8x384xf32> to vector<8x128xf32>
    %177 = vector.extract_strided_slice %175 {offsets = [0, 0], sizes = [8, 128], strides = [1, 1]} : vector<8x384xf32> to vector<8x128xf32>
    %178 = arith.addf %176, %177 : vector<8x128xf32>
    %179 = arith.negf %178 : vector<8x128xf32>
    %180 = math.exp %179 : vector<8x128xf32>
    %cst_31 = arith.constant 1.000000e+00 : f32
    %181 = vector.broadcast %cst_31 : f32 to vector<8x128xf32>
    %182 = arith.addf %181, %180 : vector<8x128xf32>
    %183 = arith.divf %181, %182 : vector<8x128xf32>
    %184 = vector.extract_strided_slice %173 {offsets = [0, 128], sizes = [8, 128], strides = [1, 1]} : vector<8x384xf32> to vector<8x128xf32>
    %185 = vector.extract_strided_slice %175 {offsets = [0, 128], sizes = [8, 128], strides = [1, 1]} : vector<8x384xf32> to vector<8x128xf32>
    %186 = arith.addf %184, %185 : vector<8x128xf32>
    %187 = arith.negf %186 : vector<8x128xf32>
    %188 = math.exp %187 : vector<8x128xf32>
    %cst_32 = arith.constant 1.000000e+00 : f32
    %189 = vector.broadcast %cst_32 : f32 to vector<8x128xf32>
    %190 = arith.addf %189, %188 : vector<8x128xf32>
    %191 = arith.divf %189, %190 : vector<8x128xf32>
    %192 = vector.extract_strided_slice %173 {offsets = [0, 256], sizes = [8, 128], strides = [1, 1]} : vector<8x384xf32> to vector<8x128xf32>
    %193 = arith.addf %192, %13 : vector<8x128xf32>
    %194 = vector.extract_strided_slice %175 {offsets = [0, 256], sizes = [8, 128], strides = [1, 1]} : vector<8x384xf32> to vector<8x128xf32>
    %195 = arith.mulf %183, %194 : vector<8x128xf32>
    %196 = arith.addf %193, %195 : vector<8x128xf32>
    %197 = math.tanh %196 : vector<8x128xf32>
    %cst_33 = arith.constant 1.000000e+00 : f32
    %198 = vector.broadcast %cst_33 : f32 to vector<8x128xf32>
    %199 = arith.subf %198, %191 : vector<8x128xf32>
    %200 = arith.mulf %199, %197 : vector<8x128xf32>
    %201 = arith.mulf %191, %172 : vector<8x128xf32>
    %202 = arith.addf %200, %201 : vector<8x128xf32>
    %203 = vector.extract_strided_slice %21 {offsets = [48, 0], sizes = [8, 384], strides = [1, 1]} : vector<64x384xf32> to vector<8x384xf32>
    %cst_34 = arith.constant dense<0.000000e+00> : vector<8x384xf32>
    %204 = tpu.matmul %202, %2, %cst_34 {dimension_numbers = #tpu.dot_dimension_numbers<[1], [0], [0], [1], [0, 0, 1, 1], [], []>} : vector<8x128xf32>, vector<128x384xf32>, vector<8x384xf32> -> vector<8x384xf32>
    %205 = arith.addf %204, %10 : vector<8x384xf32>
    %206 = vector.extract_strided_slice %203 {offsets = [0, 0], sizes = [8, 128], strides = [1, 1]} : vector<8x384xf32> to vector<8x128xf32>
    %207 = vector.extract_strided_slice %205 {offsets = [0, 0], sizes = [8, 128], strides = [1, 1]} : vector<8x384xf32> to vector<8x128xf32>
    %208 = arith.addf %206, %207 : vector<8x128xf32>
    %209 = arith.negf %208 : vector<8x128xf32>
    %210 = math.exp %209 : vector<8x128xf32>
    %cst_35 = arith.constant 1.000000e+00 : f32
    %211 = vector.broadcast %cst_35 : f32 to vector<8x128xf32>
    %212 = arith.addf %211, %210 : vector<8x128xf32>
    %213 = arith.divf %211, %212 : vector<8x128xf32>
    %214 = vector.extract_strided_slice %203 {offsets = [0, 128], sizes = [8, 128], strides = [1, 1]} : vector<8x384xf32> to vector<8x128xf32>
    %215 = vector.extract_strided_slice %205 {offsets = [0, 128], sizes = [8, 128], strides = [1, 1]} : vector<8x384xf32> to vector<8x128xf32>
    %216 = arith.addf %214, %215 : vector<8x128xf32>
    %217 = arith.negf %216 : vector<8x128xf32>
    %218 = math.exp %217 : vector<8x128xf32>
    %cst_36 = arith.constant 1.000000e+00 : f32
    %219 = vector.broadcast %cst_36 : f32 to vector<8x128xf32>
    %220 = arith.addf %219, %218 : vector<8x128xf32>
    %221 = arith.divf %219, %220 : vector<8x128xf32>
    %222 = vector.extract_strided_slice %203 {offsets = [0, 256], sizes = [8, 128], strides = [1, 1]} : vector<8x384xf32> to vector<8x128xf32>
    %223 = arith.addf %222, %13 : vector<8x128xf32>
    %224 = vector.extract_strided_slice %205 {offsets = [0, 256], sizes = [8, 128], strides = [1, 1]} : vector<8x384xf32> to vector<8x128xf32>
    %225 = arith.mulf %213, %224 : vector<8x128xf32>
    %226 = arith.addf %223, %225 : vector<8x128xf32>
    %227 = math.tanh %226 : vector<8x128xf32>
    %cst_37 = arith.constant 1.000000e+00 : f32
    %228 = vector.broadcast %cst_37 : f32 to vector<8x128xf32>
    %229 = arith.subf %228, %221 : vector<8x128xf32>
    %230 = arith.mulf %229, %227 : vector<8x128xf32>
    %231 = arith.mulf %221, %202 : vector<8x128xf32>
    %232 = arith.addf %230, %231 : vector<8x128xf32>
    %233 = vector.extract_strided_slice %21 {offsets = [56, 0], sizes = [8, 384], strides = [1, 1]} : vector<64x384xf32> to vector<8x384xf32>
    %cst_38 = arith.constant dense<0.000000e+00> : vector<8x384xf32>
    %234 = tpu.matmul %232, %2, %cst_38 {dimension_numbers = #tpu.dot_dimension_numbers<[1], [0], [0], [1], [0, 0, 1, 1], [], []>} : vector<8x128xf32>, vector<128x384xf32>, vector<8x384xf32> -> vector<8x384xf32>
    %235 = arith.addf %234, %10 : vector<8x384xf32>
    %236 = vector.extract_strided_slice %233 {offsets = [0, 0], sizes = [8, 128], strides = [1, 1]} : vector<8x384xf32> to vector<8x128xf32>
    %237 = vector.extract_strided_slice %235 {offsets = [0, 0], sizes = [8, 128], strides = [1, 1]} : vector<8x384xf32> to vector<8x128xf32>
    %238 = arith.addf %236, %237 : vector<8x128xf32>
    %239 = arith.negf %238 : vector<8x128xf32>
    %240 = math.exp %239 : vector<8x128xf32>
    %cst_39 = arith.constant 1.000000e+00 : f32
    %241 = vector.broadcast %cst_39 : f32 to vector<8x128xf32>
    %242 = arith.addf %241, %240 : vector<8x128xf32>
    %243 = arith.divf %241, %242 : vector<8x128xf32>
    %244 = vector.extract_strided_slice %233 {offsets = [0, 128], sizes = [8, 128], strides = [1, 1]} : vector<8x384xf32> to vector<8x128xf32>
    %245 = vector.extract_strided_slice %235 {offsets = [0, 128], sizes = [8, 128], strides = [1, 1]} : vector<8x384xf32> to vector<8x128xf32>
    %246 = arith.addf %244, %245 : vector<8x128xf32>
    %247 = arith.negf %246 : vector<8x128xf32>
    %248 = math.exp %247 : vector<8x128xf32>
    %cst_40 = arith.constant 1.000000e+00 : f32
    %249 = vector.broadcast %cst_40 : f32 to vector<8x128xf32>
    %250 = arith.addf %249, %248 : vector<8x128xf32>
    %251 = arith.divf %249, %250 : vector<8x128xf32>
    %252 = vector.extract_strided_slice %233 {offsets = [0, 256], sizes = [8, 128], strides = [1, 1]} : vector<8x384xf32> to vector<8x128xf32>
    %253 = arith.addf %252, %13 : vector<8x128xf32>
    %254 = vector.extract_strided_slice %235 {offsets = [0, 256], sizes = [8, 128], strides = [1, 1]} : vector<8x384xf32> to vector<8x128xf32>
    %255 = arith.mulf %243, %254 : vector<8x128xf32>
    %256 = arith.addf %253, %255 : vector<8x128xf32>
    %257 = math.tanh %256 : vector<8x128xf32>
    %cst_41 = arith.constant 1.000000e+00 : f32
    %258 = vector.broadcast %cst_41 : f32 to vector<8x128xf32>
    %259 = arith.subf %258, %251 : vector<8x128xf32>
    %260 = arith.mulf %259, %257 : vector<8x128xf32>
    %261 = arith.mulf %251, %232 : vector<8x128xf32>
    %262 = arith.addf %260, %261 : vector<8x128xf32>
    %263 = vector.extract_strided_slice %20 {offsets = [56, 0], sizes = [8, 8], strides = [1, 1]} : vector<64x8xf32> to vector<8x8xf32>
    %264 = vector.extract_strided_slice %4 {offsets = [0, 0], sizes = [8, 512], strides = [1, 1]} : vector<128x512xf32> to vector<8x512xf32>
    %cst_42 = arith.constant dense<0.000000e+00> : vector<8x512xf32>
    %265 = tpu.matmul %263, %264, %cst_42 {dimension_numbers = #tpu.dot_dimension_numbers<[1], [0], [0], [1], [0, 0, 1, 1], [], []>} : vector<8x8xf32>, vector<8x512xf32>, vector<8x512xf32> -> vector<8x512xf32>
    %cst_43 = arith.constant dense<0.000000e+00> : vector<8x512xf32>
    %266 = tpu.matmul %262, %5, %cst_43 {dimension_numbers = #tpu.dot_dimension_numbers<[1], [0], [0], [1], [0, 0, 1, 1], [], []>} : vector<8x128xf32>, vector<128x512xf32>, vector<8x512xf32> -> vector<8x512xf32>
    %267 = arith.addf %265, %266 : vector<8x512xf32>
    %268 = arith.addf %267, %16 : vector<8x512xf32>
    %269 = vector.extract_strided_slice %268 {offsets = [0, 0], sizes = [8, 128], strides = [1, 1]} : vector<8x512xf32> to vector<8x128xf32>
    %270 = arith.negf %269 : vector<8x128xf32>
    %271 = math.exp %270 : vector<8x128xf32>
    %cst_44 = arith.constant 1.000000e+00 : f32
    %272 = vector.broadcast %cst_44 : f32 to vector<8x128xf32>
    %273 = arith.addf %272, %271 : vector<8x128xf32>
    %274 = arith.divf %272, %273 : vector<8x128xf32>
    %275 = vector.extract_strided_slice %268 {offsets = [0, 128], sizes = [8, 128], strides = [1, 1]} : vector<8x512xf32> to vector<8x128xf32>
    %276 = arith.negf %275 : vector<8x128xf32>
    %277 = math.exp %276 : vector<8x128xf32>
    %cst_45 = arith.constant 1.000000e+00 : f32
    %278 = vector.broadcast %cst_45 : f32 to vector<8x128xf32>
    %279 = arith.addf %278, %277 : vector<8x128xf32>
    %280 = arith.divf %278, %279 : vector<8x128xf32>
    %281 = vector.extract_strided_slice %268 {offsets = [0, 256], sizes = [8, 128], strides = [1, 1]} : vector<8x512xf32> to vector<8x128xf32>
    %282 = vector.extract_strided_slice %268 {offsets = [0, 384], sizes = [8, 128], strides = [1, 1]} : vector<8x512xf32> to vector<8x128xf32>
    %283 = arith.mulf %274, %282 : vector<8x128xf32>
    %284 = arith.addf %281, %283 : vector<8x128xf32>
    %285 = math.tanh %284 : vector<8x128xf32>
    %cst_46 = arith.constant 1.000000e+00 : f32
    %286 = vector.broadcast %cst_46 : f32 to vector<8x128xf32>
    %287 = arith.subf %286, %280 : vector<8x128xf32>
    %288 = arith.mulf %287, %285 : vector<8x128xf32>
    %289 = arith.mulf %280, %262 : vector<8x128xf32>
    %290 = arith.addf %288, %289 : vector<8x128xf32>
    %cst_47 = arith.constant dense<0.000000e+00> : vector<8x128xf32>
    %291 = tpu.matmul %290, %6, %cst_47 {dimension_numbers = #tpu.dot_dimension_numbers<[1], [0], [0], [1], [0, 0, 1, 1], [], []>} : vector<8x128xf32>, vector<128x128xf32>, vector<8x128xf32> -> vector<8x128xf32>
    %292 = arith.addf %291, %19 : vector<8x128xf32>
    %293 = tpu.concatenate %292, %290 in 1 : vector<8x128xf32>, vector<8x128xf32> -> vector<8x256xf32>
    %cst_48 = arith.constant dense<0.000000e+00> : vector<8x512xf32>
    %294 = tpu.matmul %293, %3, %cst_48 {dimension_numbers = #tpu.dot_dimension_numbers<[1], [0], [0], [1], [0, 0, 1, 1], [], []>} : vector<8x256xf32>, vector<256x512xf32>, vector<8x512xf32> -> vector<8x512xf32>
    %295 = arith.addf %294, %16 : vector<8x512xf32>
    %296 = vector.extract_strided_slice %295 {offsets = [0, 0], sizes = [8, 128], strides = [1, 1]} : vector<8x512xf32> to vector<8x128xf32>
    %297 = arith.negf %296 : vector<8x128xf32>
    %298 = math.exp %297 : vector<8x128xf32>
    %cst_49 = arith.constant 1.000000e+00 : f32
    %299 = vector.broadcast %cst_49 : f32 to vector<8x128xf32>
    %300 = arith.addf %299, %298 : vector<8x128xf32>
    %301 = arith.divf %299, %300 : vector<8x128xf32>
    %302 = vector.extract_strided_slice %295 {offsets = [0, 128], sizes = [8, 128], strides = [1, 1]} : vector<8x512xf32> to vector<8x128xf32>
    %303 = arith.negf %302 : vector<8x128xf32>
    %304 = math.exp %303 : vector<8x128xf32>
    %cst_50 = arith.constant 1.000000e+00 : f32
    %305 = vector.broadcast %cst_50 : f32 to vector<8x128xf32>
    %306 = arith.addf %305, %304 : vector<8x128xf32>
    %307 = arith.divf %305, %306 : vector<8x128xf32>
    %308 = vector.extract_strided_slice %295 {offsets = [0, 256], sizes = [8, 128], strides = [1, 1]} : vector<8x512xf32> to vector<8x128xf32>
    %309 = vector.extract_strided_slice %295 {offsets = [0, 384], sizes = [8, 128], strides = [1, 1]} : vector<8x512xf32> to vector<8x128xf32>
    %310 = arith.mulf %301, %309 : vector<8x128xf32>
    %311 = arith.addf %308, %310 : vector<8x128xf32>
    %312 = math.tanh %311 : vector<8x128xf32>
    %cst_51 = arith.constant 1.000000e+00 : f32
    %313 = vector.broadcast %cst_51 : f32 to vector<8x128xf32>
    %314 = arith.subf %313, %307 : vector<8x128xf32>
    %315 = arith.mulf %314, %312 : vector<8x128xf32>
    %316 = arith.mulf %307, %290 : vector<8x128xf32>
    %317 = arith.addf %315, %316 : vector<8x128xf32>
    %cst_52 = arith.constant dense<0.000000e+00> : vector<8x128xf32>
    %318 = tpu.matmul %317, %6, %cst_52 {dimension_numbers = #tpu.dot_dimension_numbers<[1], [0], [0], [1], [0, 0, 1, 1], [], []>} : vector<8x128xf32>, vector<128x128xf32>, vector<8x128xf32> -> vector<8x128xf32>
    %319 = arith.addf %318, %19 : vector<8x128xf32>
    %320 = tpu.concatenate %319, %317 in 1 : vector<8x128xf32>, vector<8x128xf32> -> vector<8x256xf32>
    %cst_53 = arith.constant dense<0.000000e+00> : vector<8x512xf32>
    %321 = tpu.matmul %320, %3, %cst_53 {dimension_numbers = #tpu.dot_dimension_numbers<[1], [0], [0], [1], [0, 0, 1, 1], [], []>} : vector<8x256xf32>, vector<256x512xf32>, vector<8x512xf32> -> vector<8x512xf32>
    %322 = arith.addf %321, %16 : vector<8x512xf32>
    %323 = vector.extract_strided_slice %322 {offsets = [0, 0], sizes = [8, 128], strides = [1, 1]} : vector<8x512xf32> to vector<8x128xf32>
    %324 = arith.negf %323 : vector<8x128xf32>
    %325 = math.exp %324 : vector<8x128xf32>
    %cst_54 = arith.constant 1.000000e+00 : f32
    %326 = vector.broadcast %cst_54 : f32 to vector<8x128xf32>
    %327 = arith.addf %326, %325 : vector<8x128xf32>
    %328 = arith.divf %326, %327 : vector<8x128xf32>
    %329 = vector.extract_strided_slice %322 {offsets = [0, 128], sizes = [8, 128], strides = [1, 1]} : vector<8x512xf32> to vector<8x128xf32>
    %330 = arith.negf %329 : vector<8x128xf32>
    %331 = math.exp %330 : vector<8x128xf32>
    %cst_55 = arith.constant 1.000000e+00 : f32
    %332 = vector.broadcast %cst_55 : f32 to vector<8x128xf32>
    %333 = arith.addf %332, %331 : vector<8x128xf32>
    %334 = arith.divf %332, %333 : vector<8x128xf32>
    %335 = vector.extract_strided_slice %322 {offsets = [0, 256], sizes = [8, 128], strides = [1, 1]} : vector<8x512xf32> to vector<8x128xf32>
    %336 = vector.extract_strided_slice %322 {offsets = [0, 384], sizes = [8, 128], strides = [1, 1]} : vector<8x512xf32> to vector<8x128xf32>
    %337 = arith.mulf %328, %336 : vector<8x128xf32>
    %338 = arith.addf %335, %337 : vector<8x128xf32>
    %339 = math.tanh %338 : vector<8x128xf32>
    %cst_56 = arith.constant 1.000000e+00 : f32
    %340 = vector.broadcast %cst_56 : f32 to vector<8x128xf32>
    %341 = arith.subf %340, %334 : vector<8x128xf32>
    %342 = arith.mulf %341, %339 : vector<8x128xf32>
    %343 = arith.mulf %334, %317 : vector<8x128xf32>
    %344 = arith.addf %342, %343 : vector<8x128xf32>
    %cst_57 = arith.constant dense<0.000000e+00> : vector<8x128xf32>
    %345 = tpu.matmul %344, %6, %cst_57 {dimension_numbers = #tpu.dot_dimension_numbers<[1], [0], [0], [1], [0, 0, 1, 1], [], []>} : vector<8x128xf32>, vector<128x128xf32>, vector<8x128xf32> -> vector<8x128xf32>
    %346 = arith.addf %345, %19 : vector<8x128xf32>
    %347 = tpu.concatenate %346, %344 in 1 : vector<8x128xf32>, vector<8x128xf32> -> vector<8x256xf32>
    %cst_58 = arith.constant dense<0.000000e+00> : vector<8x512xf32>
    %348 = tpu.matmul %347, %3, %cst_58 {dimension_numbers = #tpu.dot_dimension_numbers<[1], [0], [0], [1], [0, 0, 1, 1], [], []>} : vector<8x256xf32>, vector<256x512xf32>, vector<8x512xf32> -> vector<8x512xf32>
    %349 = arith.addf %348, %16 : vector<8x512xf32>
    %350 = vector.extract_strided_slice %349 {offsets = [0, 0], sizes = [8, 128], strides = [1, 1]} : vector<8x512xf32> to vector<8x128xf32>
    %351 = arith.negf %350 : vector<8x128xf32>
    %352 = math.exp %351 : vector<8x128xf32>
    %cst_59 = arith.constant 1.000000e+00 : f32
    %353 = vector.broadcast %cst_59 : f32 to vector<8x128xf32>
    %354 = arith.addf %353, %352 : vector<8x128xf32>
    %355 = arith.divf %353, %354 : vector<8x128xf32>
    %356 = vector.extract_strided_slice %349 {offsets = [0, 128], sizes = [8, 128], strides = [1, 1]} : vector<8x512xf32> to vector<8x128xf32>
    %357 = arith.negf %356 : vector<8x128xf32>
    %358 = math.exp %357 : vector<8x128xf32>
    %cst_60 = arith.constant 1.000000e+00 : f32
    %359 = vector.broadcast %cst_60 : f32 to vector<8x128xf32>
    %360 = arith.addf %359, %358 : vector<8x128xf32>
    %361 = arith.divf %359, %360 : vector<8x128xf32>
    %362 = vector.extract_strided_slice %349 {offsets = [0, 256], sizes = [8, 128], strides = [1, 1]} : vector<8x512xf32> to vector<8x128xf32>
    %363 = vector.extract_strided_slice %349 {offsets = [0, 384], sizes = [8, 128], strides = [1, 1]} : vector<8x512xf32> to vector<8x128xf32>
    %364 = arith.mulf %355, %363 : vector<8x128xf32>
    %365 = arith.addf %362, %364 : vector<8x128xf32>
    %366 = math.tanh %365 : vector<8x128xf32>
    %cst_61 = arith.constant 1.000000e+00 : f32
    %367 = vector.broadcast %cst_61 : f32 to vector<8x128xf32>
    %368 = arith.subf %367, %361 : vector<8x128xf32>
    %369 = arith.mulf %368, %366 : vector<8x128xf32>
    %370 = arith.mulf %361, %344 : vector<8x128xf32>
    %371 = arith.addf %369, %370 : vector<8x128xf32>
    %cst_62 = arith.constant dense<0.000000e+00> : vector<8x128xf32>
    %372 = tpu.matmul %371, %6, %cst_62 {dimension_numbers = #tpu.dot_dimension_numbers<[1], [0], [0], [1], [0, 0, 1, 1], [], []>} : vector<8x128xf32>, vector<128x128xf32>, vector<8x128xf32> -> vector<8x128xf32>
    %373 = arith.addf %372, %19 : vector<8x128xf32>
    %374 = tpu.concatenate %292, %319, %346, %373 in 1 : vector<8x128xf32>, vector<8x128xf32>, vector<8x128xf32>, vector<8x128xf32> -> vector<8x512xf32>
    %c0_63 = arith.constant 0 : index
    %c0_64 = arith.constant 0 : index
    %375 = vector.load %arg6[%c0_63, %c0_64] : memref<8x512xf32, #tpu.memory_space<vmem>>, vector<8x512xf32>
    tpu.vector_store %arg6[%c0_63, %c0_64], %374 {strides = array<i32>} : memref<8x512xf32, #tpu.memory_space<vmem>>, vector<8x512xf32>,
    return
  }
  func.func @transform_0(%arg0: i32) -> (i32, i32) {
    %c0_i32 = arith.constant 0 : i32
    %c0_i32_0 = arith.constant 0 : i32
    return %arg0, %c0_i32 : i32, i32
  }
  func.func @transform_1(%arg0: i32) -> (i32, i32) {
    %c0_i32 = arith.constant 0 : i32
    %c0_i32_0 = arith.constant 0 : i32
    %c0_i32_1 = arith.constant 0 : i32
    return %c0_i32, %c0_i32_0 : i32, i32
  }
  func.func @transform_2(%arg0: i32) -> (i32, i32) {
    %c0_i32 = arith.constant 0 : i32
    %c0_i32_0 = arith.constant 0 : i32
    %c0_i32_1 = arith.constant 0 : i32
    return %c0_i32, %c0_i32_0 : i32, i32
  }
  func.func @transform_3(%arg0: i32) -> (i32, i32) {
    %c0_i32 = arith.constant 0 : i32
    %c0_i32_0 = arith.constant 0 : i32
    %c0_i32_1 = arith.constant 0 : i32
    return %c0_i32, %c0_i32_0 : i32, i32
  }
  func.func @transform_4(%arg0: i32) -> (i32, i32) {
    %c0_i32 = arith.constant 0 : i32
    %c0_i32_0 = arith.constant 0 : i32
    %c0_i32_1 = arith.constant 0 : i32
    return %c0_i32, %c0_i32_0 : i32, i32
  }
  func.func @transform_5(%arg0: i32) -> (i32, i32) {
    %c0_i32 = arith.constant 0 : i32
    %c0_i32_0 = arith.constant 0 : i32
    return %arg0, %c0_i32 : i32, i32
  }
}

</mosaic_0001>

<llo_original>
// kernel: seq2seq_forward.1
$region0: #{seq2seq_forward.1}
  #allocation0 [shape = 'u32[]', space=smem, size = 0x4, offset = 0x4, fixed_abs, tag = 'smem constant byte address 0x4 - core index']
  #allocation1 [shape = 'u32[72,128]{1,0:T(1,128)}', space=vmem, size = 0x9000, scoped, tag = 'internal scratch']
  %s0 = inlined_call_operand.vmem [shape: f32[64,8], index: 0, kind: input, shape index: {}]
  %s1 = inlined_call_operand.hbm [shape: f32[136,384], index: 1, kind: input, shape index: {}]
  %s2 = inlined_call_operand.hbm [shape: f32[256,512], index: 2, kind: input, shape index: {}]
  %s3 = inlined_call_operand.vmem [shape: f32[128,128], index: 3, kind: input, shape index: {}]
  %s4 = inlined_call_operand.vmem [shape: f32[8,512], index: 4, kind: input, shape index: {}]
  %s5 = inlined_call_operand.vmem [shape: f32[8,512], index: 5, kind: output, shape index: {}]
  %s6 = sld [smem:[#allocation0]]
  $region38: #{seq2seq_forward.1} parent=0
    _
  %s8 = ssub.s32 1, %s6
  %s9 = scalar_select 0, %s8, %s6
  $region1: #{seq2seq_forward.1} parent=0
    #allocation2 [shape = 'u8[208896]{0}', space=vmem, size = 0x33000, scoped, tag = 'input window, operand 1, single buffered']
    #allocation3 [shape = 's32[1]{0}', space=sflag, size = 0x4, scoped, tag = 'scoped memory for seq2seq_forward.1']
    #allocation4 [shape = 'u8[524288]{0}', space=vmem, size = 0x80000, scoped, tag = 'input window, operand 2, single buffered']
    #allocation5 [shape = 's32[1]{0}', space=sflag, size = 0x4, scoped, tag = 'scoped memory for seq2seq_forward.1']
    %10 = vsyncpa [#allocation3], 0
    %11 = vsyncpa [#allocation5], 0
    // Predicated region
    $region2: #{seq2seq_forward.1} parent=1 // pred_check
      _
    $region3: #{seq2seq_forward.1} parent=1 // pred_check_branch
      %13 = sbr.rel (0) target = $region5
    $region4: #{seq2seq_forward.1} parent=1 // pred_region
      _
    $region5: #{seq2seq_forward.1} parent=1 // pred_fallthru
      _
    // Predicated region
    $region6: #{seq2seq_forward.1} parent=1 // pred_check
      _
    $region7: #{seq2seq_forward.1} parent=1 // pred_check_branch
      %15 = sbr.rel (0) target = $region9
    $region8: #{seq2seq_forward.1} parent=1 // pred_region
      %17 = vsyncadd [#allocation3], 0
      %s18 = sshll.u32 %s1, 4
      %s19 = int_to_ptr.hbm [resolvable:$true] %s18
      %s20 = sshll.u32 [#allocation2], 4
      %s21 = int_to_ptr.vmem [resolvable:$true] %s20
      %26 = dma.hbm_to_vmem [thread:$0]  %s19, 6528, %s21, [#allocation3], 384, 384, 24
    $region9: #{seq2seq_forward.1} parent=1 // pred_fallthru
      _
    // Predicated region
    $region10: #{seq2seq_forward.1} parent=1 // pred_check
      _
    $region11: #{seq2seq_forward.1} parent=1 // pred_check_branch
      %28 = sbr.rel (0) target = $region13
    $region12: #{seq2seq_forward.1} parent=1 // pred_region
      %30 = vsyncadd [#allocation5], 0
      %s31 = sshll.u32 %s2, 4
      %s32 = int_to_ptr.hbm [resolvable:$true] %s31
      %s33 = sshll.u32 [#allocation4], 4
      %s34 = int_to_ptr.vmem [resolvable:$true] %s33
      %39 = dma.hbm_to_vmem [thread:$0]  %s32, 16384, %s34, [#allocation5], 512, 512, 32
    $region13: #{seq2seq_forward.1} parent=1 // pred_fallthru
      _
    // Predicated region
    $region14: #{seq2seq_forward.1} parent=1 // pred_check
      _
    $region15: #{seq2seq_forward.1} parent=1 // pred_check_branch
      %41 = sbr.rel (0) target = $region17
    $region16: #{seq2seq_forward.1} parent=1 // pred_region
      _
    $region17: #{seq2seq_forward.1} parent=1 // pred_fallthru
      _
    // Predicated region
    $region18: #{seq2seq_forward.1} parent=1 // pred_check
      _
    $region19: #{seq2seq_forward.1} parent=1 // pred_check_branch
      %43 = sbr.rel (0) target = $region21
    $region20: #{seq2seq_forward.1} parent=1 // pred_region
      _
    $region21: #{seq2seq_forward.1} parent=1 // pred_fallthru
      _
    // Predicated region
    $region22: #{seq2seq_forward.1} parent=1 // pred_check
      _
    $region23: #{seq2seq_forward.1} parent=1 // pred_check_branch
      %45 = sbr.rel (0) target = $region25
    $region24: #{seq2seq_forward.1} parent=1 // pred_region
      %47 = dma.done [#allocation3], 6528
    $region25: #{seq2seq_forward.1} parent=1 // pred_fallthru
      _
    // Predicated region
    $region26: #{seq2seq_forward.1} parent=1 // pred_check
      _
    $region27: #{seq2seq_forward.1} parent=1 // pred_check_branch
      %49 = sbr.rel (0) target = $region29
    $region28: #{seq2seq_forward.1} parent=1 // pred_region
      %51 = dma.done [#allocation5], 16384
    $region29: #{seq2seq_forward.1} parent=1 // pred_fallthru
      _
    %v52 = vld [vmem:[#allocation2] sm:$0xff]
    %v53 = vld [vmem:[#allocation2 + $0x8] sm:$0xff]
    %v54 = vld [vmem:[#allocation2 + $0x10] sm:$0xff]
    %v55 = vld [vmem:[#allocation2 + $0x18] sm:$0xff]
    %v56 = vld [vmem:[#allocation2 + $0x20] sm:$0xff]
    %v57 = vld [vmem:[#allocation2 + $0x28] sm:$0xff]
    %v58 = vld [vmem:[#allocation2 + $0x30] sm:$0xff]
    %v59 = vld [vmem:[#allocation2 + $0x38] sm:$0xff]
    %v60 = vld [vmem:[#allocation2 + $0x40] sm:$0xff]
    %v61 = vld [vmem:[#allocation2 + $0x48] sm:$0xff]
    %v62 = vld [vmem:[#allocation2 + $0x50] sm:$0xff]
    %v63 = vld [vmem:[#allocation2 + $0x58] sm:$0xff]
    %v64 = vld [vmem:[#allocation2 + $0x60] sm:$0xff]
    %v65 = vld [vmem:[#allocation2 + $0x68] sm:$0xff]
    %v66 = vld [vmem:[#allocation2 + $0x70] sm:$0xff]
    %v67 = vld [vmem:[#allocation2 + $0x78] sm:$0xff]
    %v68 = vld [vmem:[#allocation2 + $0x80] sm:$0xff]
    %v69 = vld [vmem:[#allocation2 + $0x88] sm:$0xff]
    %v70 = vld [vmem:[#allocation2 + $0x90] sm:$0xff]
    %v71 = vld [vmem:[#allocation2 + $0x98] sm:$0xff]
    %v72 = vld [vmem:[#allocation2 + $0xa0] sm:$0xff]
    %v73 = vld [vmem:[#allocation2 + $0xa8] sm:$0xff]
    %v74 = vld [vmem:[#allocation2 + $0xb0] sm:$0xff]
    %v75 = vld [vmem:[#allocation2 + $0xb8] sm:$0xff]
    %v76 = vld [vmem:[#allocation2 + $0xc0] sm:$0xff]
    %v77 = vld [vmem:[#allocation2 + $0xc8] sm:$0xff]
    %v78 = vld [vmem:[#allocation2 + $0xd0] sm:$0xff]
    %v79 = vld [vmem:[#allocation2 + $0xd8] sm:$0xff]
    %v80 = vld [vmem:[#allocation2 + $0xe0] sm:$0xff]
    %v81 = vld [vmem:[#allocation2 + $0xe8] sm:$0xff]
    %v82 = vld [vmem:[#allocation2 + $0xf0] sm:$0xff]
    %v83 = vld [vmem:[#allocation2 + $0xf8] sm:$0xff]
    %v84 = vld [vmem:[#allocation2 + $0x100] sm:$0xff]
    %v85 = vld [vmem:[#allocation2 + $0x108] sm:$0xff]
    %v86 = vld [vmem:[#allocation2 + $0x110] sm:$0xff]
    %v87 = vld [vmem:[#allocation2 + $0x118] sm:$0xff]
    %v88 = vld [vmem:[#allocation2 + $0x120] sm:$0xff]
    %v89 = vld [vmem:[#allocation2 + $0x128] sm:$0xff]
    %v90 = vld [vmem:[#allocation2 + $0x130] sm:$0xff]
    %v91 = vld [vmem:[#allocation2 + $0x138] sm:$0xff]
    %v92 = vld [vmem:[#allocation2 + $0x140] sm:$0xff]
    %v93 = vld [vmem:[#allocation2 + $0x148] sm:$0xff]
    %v94 = vld [vmem:[#allocation2 + $0x150] sm:$0xff]
    %v95 = vld [vmem:[#allocation2 + $0x158] sm:$0xff]
    %v96 = vld [vmem:[#allocation2 + $0x160] sm:$0xff]
    %v97 = vld [vmem:[#allocation2 + $0x168] sm:$0xff]
    %v98 = vld [vmem:[#allocation2 + $0x170] sm:$0xff]
    %v99 = vld [vmem:[#allocation2 + $0x178] sm:$0xff]
    %v100 = vld [vmem:[#allocation2 + $0x180] sm:$0xff]
    %v101 = vld [vmem:[#allocation2 + $0x188] sm:$0xff]
    %v102 = vld [vmem:[#allocation2 + $0x190] sm:$0xff]
    %v103 = vld [vmem:[#allocation4] sm:$0xff]
    %v104 = vld [vmem:[#allocation4 + $0x8] sm:$0xff]
    %v105 = vld [vmem:[#allocation4 + $0x10] sm:$0xff]
    %v106 = vld [vmem:[#allocation4 + $0x18] sm:$0xff]
    %v107 = vld [vmem:[#allocation4 + $0x20] sm:$0xff]
    %v108 = vld [vmem:[#allocation4 + $0x28] sm:$0xff]
    %v109 = vld [vmem:[#allocation4 + $0x30] sm:$0xff]
    %v110 = vld [vmem:[#allocation4 + $0x38] sm:$0xff]
    %v111 = vld [vmem:[#allocation4 + $0x40] sm:$0xff]
    %v112 = vld [vmem:[#allocation4 + $0x48] sm:$0xff]
    %v113 = vld [vmem:[#allocation4 + $0x50] sm:$0xff]
    %v114 = vld [vmem:[#allocation4 + $0x58] sm:$0xff]
    %v115 = vld [vmem:[#allocation4 + $0x60] sm:$0xff]
    %v116 = vld [vmem:[#allocation4 + $0x68] sm:$0xff]
    %v117 = vld [vmem:[#allocation4 + $0x70] sm:$0xff]
    %v118 = vld [vmem:[#allocation4 + $0x78] sm:$0xff]
    %v119 = vld [vmem:[#allocation4 + $0x80] sm:$0xff]
    %v120 = vld [vmem:[#allocation4 + $0x88] sm:$0xff]
    %v121 = vld [vmem:[#allocation4 + $0x90] sm:$0xff]
    %v122 = vld [vmem:[#allocation4 + $0x98] sm:$0xff]
    %v123 = vld [vmem:[#allocation4 + $0xa0] sm:$0xff]
    %v124 = vld [vmem:[#allocation4 + $0xa8] sm:$0xff]
    %v125 = vld [vmem:[#allocation4 + $0xb0] sm:$0xff]
    %v126 = vld [vmem:[#allocation4 + $0xb8] sm:$0xff]
    %v127 = vld [vmem:[#allocation4 + $0xc0] sm:$0xff]
    %v128 = vld [vmem:[#allocation4 + $0xc8] sm:$0xff]
    %v129 = vld [vmem:[#allocation4 + $0xd0] sm:$0xff]
    %v130 = vld [vmem:[#allocation4 + $0xd8] sm:$0xff]
    %v131 = vld [vmem:[#allocation4 + $0xe0] sm:$0xff]
    %v132 = vld [vmem:[#allocation4 + $0xe8] sm:$0xff]
    %v133 = vld [vmem:[#allocation4 + $0xf0] sm:$0xff]
    %v134 = vld [vmem:[#allocation4 + $0xf8] sm:$0xff]
    %v135 = vld [vmem:[#allocation4 + $0x100] sm:$0xff]
    %v136 = vld [vmem:[#allocation4 + $0x108] sm:$0xff]
    %v137 = vld [vmem:[#allocation4 + $0x110] sm:$0xff]
    %v138 = vld [vmem:[#allocation4 + $0x118] sm:$0xff]
    %v139 = vld [vmem:[#allocation4 + $0x120] sm:$0xff]
    %v140 = vld [vmem:[#allocation4 + $0x128] sm:$0xff]
    %v141 = vld [vmem:[#allocation4 + $0x130] sm:$0xff]
    %v142 = vld [vmem:[#allocation4 + $0x138] sm:$0xff]
    %v143 = vld [vmem:[#allocation4 + $0x140] sm:$0xff]
    %v144 = vld [vmem:[#allocation4 + $0x148] sm:$0xff]
    %v145 = vld [vmem:[#allocation4 + $0x150] sm:$0xff]
    %v146 = vld [vmem:[#allocation4 + $0x158] sm:$0xff]
    %v147 = vld [vmem:[#allocation4 + $0x160] sm:$0xff]
    %v148 = vld [vmem:[#allocation4 + $0x168] sm:$0xff]
    %v149 = vld [vmem:[#allocation4 + $0x170] sm:$0xff]
    %v150 = vld [vmem:[#allocation4 + $0x178] sm:$0xff]
    %v151 = vld [vmem:[#allocation4 + $0x180] sm:$0xff]
    %v152 = vld [vmem:[#allocation4 + $0x188] sm:$0xff]
    %v153 = vld [vmem:[#allocation4 + $0x190] sm:$0xff]
    %v154 = vld [vmem:[#allocation4 + $0x198] sm:$0xff]
    %v155 = vld [vmem:[#allocation4 + $0x1a0] sm:$0xff]
    %v156 = vld [vmem:[#allocation4 + $0x1a8] sm:$0xff]
    %v157 = vld [vmem:[#allocation4 + $0x1b0] sm:$0xff]
    %v158 = vld [vmem:[#allocation4 + $0x1b8] sm:$0xff]
    %v159 = vld [vmem:[#allocation4 + $0x1c0] sm:$0xff]
    %v160 = vld [vmem:[#allocation4 + $0x1c8] sm:$0xff]
    %v161 = vld [vmem:[#allocation4 + $0x1d0] sm:$0xff]
    %v162 = vld [vmem:[#allocation4 + $0x1d8] sm:$0xff]
    %v163 = vld [vmem:[#allocation4 + $0x1e0] sm:$0xff]
    %v164 = vld [vmem:[#allocation4 + $0x1e8] sm:$0xff]
    %v165 = vld [vmem:[#allocation4 + $0x1f0] sm:$0xff]
    %v166 = vld [vmem:[#allocation4 + $0x1f8] sm:$0xff]
    %v167 = vld [vmem:[#allocation4 + $0x200] sm:$0xff]
    %v168 = vld [vmem:[#allocation4 + $0x208] sm:$0xff]
    %v169 = vld [vmem:[#allocation4 + $0x210] sm:$0xff]
    %v170 = vld [vmem:[#allocation4 + $0x218] sm:$0xff]
    %v171 = vld [vmem:[#allocation4 + $0x220] sm:$0xff]
    %v172 = vld [vmem:[#allocation4 + $0x228] sm:$0xff]
    %v173 = vld [vmem:[#allocation4 + $0x230] sm:$0xff]
    %v174 = vld [vmem:[#allocation4 + $0x238] sm:$0xff]
    %v175 = vld [vmem:[#allocation4 + $0x240] sm:$0xff]
    %v176 = vld [vmem:[#allocation4 + $0x248] sm:$0xff]
    %v177 = vld [vmem:[#allocation4 + $0x250] sm:$0xff]
    %v178 = vld [vmem:[#allocation4 + $0x258] sm:$0xff]
    %v179 = vld [vmem:[#allocation4 + $0x260] sm:$0xff]
    %v180 = vld [vmem:[#allocation4 + $0x268] sm:$0xff]
    %v181 = vld [vmem:[#allocation4 + $0x270] sm:$0xff]
    %v182 = vld [vmem:[#allocation4 + $0x278] sm:$0xff]
    %v183 = vld [vmem:[#allocation4 + $0x280] sm:$0xff]
    %v184 = vld [vmem:[#allocation4 + $0x288] sm:$0xff]
    %v185 = vld [vmem:[#allocation4 + $0x290] sm:$0xff]
    %v186 = vld [vmem:[#allocation4 + $0x298] sm:$0xff]
    %v187 = vld [vmem:[#allocation4 + $0x2a0] sm:$0xff]
    %v188 = vld [vmem:[#allocation4 + $0x2a8] sm:$0xff]
    %v189 = vld [vmem:[#allocation4 + $0x2b0] sm:$0xff]
    %v190 = vld [vmem:[#allocation4 + $0x2b8] sm:$0xff]
    %v191 = vld [vmem:[#allocation4 + $0x2c0] sm:$0xff]
    %v192 = vld [vmem:[#allocation4 + $0x2c8] sm:$0xff]
    %v193 = vld [vmem:[#allocation4 + $0x2d0] sm:$0xff]
    %v194 = vld [vmem:[#allocation4 + $0x2d8] sm:$0xff]
    %v195 = vld [vmem:[#allocation4 + $0x2e0] sm:$0xff]
    %v196 = vld [vmem:[#allocation4 + $0x2e8] sm:$0xff]
    %v197 = vld [vmem:[#allocation4 + $0x2f0] sm:$0xff]
    %v198 = vld [vmem:[#allocation4 + $0x2f8] sm:$0xff]
    %v199 = vld [vmem:[#allocation4 + $0x300] sm:$0xff]
    %v200 = vld [vmem:[#allocation4 + $0x308] sm:$0xff]
    %v201 = vld [vmem:[#allocation4 + $0x310] sm:$0xff]
    %v202 = vld [vmem:[#allocation4 + $0x318] sm:$0xff]
    %v203 = vld [vmem:[#allocation4 + $0x320] sm:$0xff]
    %v204 = vld [vmem:[#allocation4 + $0x328] sm:$0xff]
    %v205 = vld [vmem:[#allocation4 + $0x330] sm:$0xff]
    %v206 = vld [vmem:[#allocation4 + $0x338] sm:$0xff]
    %v207 = vld [vmem:[#allocation4 + $0x340] sm:$0xff]
    %v208 = vld [vmem:[#allocation4 + $0x348] sm:$0xff]
    %v209 = vld [vmem:[#allocation4 + $0x350] sm:$0xff]
    %v210 = vld [vmem:[#allocation4 + $0x358] sm:$0xff]
    %v211 = vld [vmem:[#allocation4 + $0x360] sm:$0xff]
    %v212 = vld [vmem:[#allocation4 + $0x368] sm:$0xff]
    %v213 = vld [vmem:[#allocation4 + $0x370] sm:$0xff]
    %v214 = vld [vmem:[#allocation4 + $0x378] sm:$0xff]
    %v215 = vld [vmem:[#allocation4 + $0x380] sm:$0xff]
    %v216 = vld [vmem:[#allocation4 + $0x388] sm:$0xff]
    %v217 = vld [vmem:[#allocation4 + $0x390] sm:$0xff]
    %v218 = vld [vmem:[#allocation4 + $0x398] sm:$0xff]
    %v219 = vld [vmem:[#allocation4 + $0x3a0] sm:$0xff]
    %v220 = vld [vmem:[#allocation4 + $0x3a8] sm:$0xff]
    %v221 = vld [vmem:[#allocation4 + $0x3b0] sm:$0xff]
    %v222 = vld [vmem:[#allocation4 + $0x3b8] sm:$0xff]
    %v223 = vld [vmem:[#allocation4 + $0x3c0] sm:$0xff]
    %v224 = vld [vmem:[#allocation4 + $0x3c8] sm:$0xff]
    %v225 = vld [vmem:[#allocation4 + $0x3d0] sm:$0xff]
    %v226 = vld [vmem:[#allocation4 + $0x3d8] sm:$0xff]
    %v227 = vld [vmem:[#allocation4 + $0x3e0] sm:$0xff]
    %v228 = vld [vmem:[#allocation4 + $0x3e8] sm:$0xff]
    %v229 = vld [vmem:[#allocation4 + $0x3f0] sm:$0xff]
    %v230 = vld [vmem:[#allocation4 + $0x3f8] sm:$0xff]
    %v231 = vld [vmem:[%s3] sm:$0xff]
    %v232 = vld [vmem:[%s3 + $0x8] sm:$0xff]
    %v233 = vld [vmem:[%s3 + $0x10] sm:$0xff]
    %v234 = vld [vmem:[%s3 + $0x18] sm:$0xff]
    %v235 = vld [vmem:[%s3 + $0x20] sm:$0xff]
    %v236 = vld [vmem:[%s3 + $0x28] sm:$0xff]
    %v237 = vld [vmem:[%s3 + $0x30] sm:$0xff]
    %v238 = vld [vmem:[%s3 + $0x38] sm:$0xff]
    %v239 = vld [vmem:[%s3 + $0x40] sm:$0xff]
    %v240 = vld [vmem:[%s3 + $0x48] sm:$0xff]
    %v241 = vld [vmem:[%s3 + $0x50] sm:$0xff]
    %v242 = vld [vmem:[%s3 + $0x58] sm:$0xff]
    %v243 = vld [vmem:[%s3 + $0x60] sm:$0xff]
    %v244 = vld [vmem:[%s3 + $0x68] sm:$0xff]
    %v245 = vld [vmem:[%s3 + $0x70] sm:$0xff]
    %v246 = vld [vmem:[%s3 + $0x78] sm:$0xff]
    %v247 = vld [vmem:[%s4] sm:$0xff]
    %v248 = vld [vmem:[%s4 + $0x8] sm:$0xff]
    %v249 = vld [vmem:[%s4 + $0x10] sm:$0xff]
    %v250 = vld [vmem:[%s4 + $0x18] sm:$0xff]
    %v251 = vperm.slane %v247, 0
    %v252 = vperm.slane %v248, 0
    %v253 = vperm.slane %v249, 0
    %v254 = vperm.slane %v247, 1
    %v255 = vperm.slane %v247, 2
    %v256 = vperm.slane %v248, 2
    %v257 = vperm.slane %v249, 2
    %v258 = vperm.slane %v250, 2
    %v259 = vperm.slane %v247, 3
    %v260 = vld [vmem:[%s0] sm:$0xff]
    %v261 = vld [vmem:[%s0 + $0x8] sm:$0xff]
    %v262 = vld [vmem:[%s0 + $0x10] sm:$0xff]
    %v263 = vld [vmem:[%s0 + $0x18] sm:$0xff]
    %v264 = vld [vmem:[%s0 + $0x20] sm:$0xff]
    %v265 = vld [vmem:[%s0 + $0x28] sm:$0xff]
    %v266 = vld [vmem:[%s0 + $0x30] sm:$0xff]
    %v267 = vld [vmem:[%s0 + $0x38] sm:$0xff]
    %vm268 = vcmask 64512
    %v270 = vsel %vm268, %v260, 0
    %v273 = vsel %vm268, %v261, 0
    %v276 = vsel %vm268, %v262, 0
    %v279 = vsel %vm268, %v263, 0
    %v282 = vsel %vm268, %v264, 0
    %v285 = vsel %vm268, %v265, 0
    %v288 = vsel %vm268, %v266, 0
    %v291 = vsel %vm268, %v267, 0
    %293 = vmatpush.msra.mxu0 0.0
    %294 = vmatpush.msra.mxu0 0.0
    %295 = vmatpush.msra.mxu0 0.0
    %296 = vmatpush.msra.mxu0 0.0
    %297 = vmatpush.msra.mxu0 0.0
    %298 = vmatpush.msra.mxu0 0.0
    %299 = vmatpush.msra.mxu0 0.0
    %300 = vmatpush.msra.mxu0 0.0
    %301 = vmatpush.msra.mxu0 0.0
    %302 = vmatpush.msra.mxu0 0.0
    %303 = vmatpush.msra.mxu0 0.0
    %304 = vmatpush.msra.mxu0 0.0
    %305 = vmatpush.msra.mxu0 0.0
    %306 = vmatpush.msra.mxu0 0.0
    %307 = vmatpush.msra.mxu0 0.0
    %308 = vmatpush.msra.mxu0 %v52
    %309 = vmatmul.f32.gmra.mxu0 %v270
    %v310 = vpop.f32.mrf.mxu0
    %v311 = vadd.f32 0.0, %v310
    %312 = vmatmul.f32.gmra.mxu0 %v273
    %v313 = vpop.f32.mrf.mxu0
    %v314 = vadd.f32 0.0, %v313
    %315 = vmatmul.f32.gmra.mxu0 %v276
    %v316 = vpop.f32.mrf.mxu0
    %v317 = vadd.f32 0.0, %v316
    %318 = vmatmul.f32.gmra.mxu0 %v279
    %v319 = vpop.f32.mrf.mxu0
    %v320 = vadd.f32 0.0, %v319
    %321 = vmatmul.f32.gmra.mxu0 %v282
    %v322 = vpop.f32.mrf.mxu0
    %v323 = vadd.f32 0.0, %v322
    %324 = vmatmul.f32.gmra.mxu0 %v285
    %v325 = vpop.f32.mrf.mxu0
    %v326 = vadd.f32 0.0, %v325
    %327 = vmatmul.f32.gmra.mxu0 %v288
    %v328 = vpop.f32.mrf.mxu0
    %v329 = vadd.f32 0.0, %v328
    %330 = vmatmul.f32.gmra.mxu0 %v291
    %v331 = vpop.f32.mrf.mxu0
    %v332 = vadd.f32 0.0, %v331
    %333 = vdwg.mxu0
    %334 = vmatpush.msra.mxu0 0.0
    %335 = vmatpush.msra.mxu0 0.0
    %336 = vmatpush.msra.mxu0 0.0
    %337 = vmatpush.msra.mxu0 0.0
    %338 = vmatpush.msra.mxu0 0.0
    %339 = vmatpush.msra.mxu0 0.0
    %340 = vmatpush.msra.mxu0 0.0
    %341 = vmatpush.msra.mxu0 0.0
    %342 = vmatpush.msra.mxu0 0.0
    %343 = vmatpush.msra.mxu0 0.0
    %344 = vmatpush.msra.mxu0 0.0
    %345 = vmatpush.msra.mxu0 0.0
    %346 = vmatpush.msra.mxu0 0.0
    %347 = vmatpush.msra.mxu0 0.0
    %348 = vmatpush.msra.mxu0 0.0
    %349 = vmatpush.msra.mxu0 %v53
    %350 = vmatmul.f32.gmra.mxu0 %v270
    %v351 = vpop.f32.mrf.mxu0
    %v352 = vadd.f32 0.0, %v351
    %353 = vmatmul.f32.gmra.mxu0 %v273
    %v354 = vpop.f32.mrf.mxu0
    %v355 = vadd.f32 0.0, %v354
    %356 = vmatmul.f32.gmra.mxu0 %v276
    %v357 = vpop.f32.mrf.mxu0
    %v358 = vadd.f32 0.0, %v357
    %359 = vmatmul.f32.gmra.mxu0 %v279
    %v360 = vpop.f32.mrf.mxu0
    %v361 = vadd.f32 0.0, %v360
    %362 = vmatmul.f32.gmra.mxu0 %v282
    %v363 = vpop.f32.mrf.mxu0
    %v364 = vadd.f32 0.0, %v363
    %365 = vmatmul.f32.gmra.mxu0 %v285
    %v366 = vpop.f32.mrf.mxu0
    %v367 = vadd.f32 0.0, %v366
    %368 = vmatmul.f32.gmra.mxu0 %v288
    %v369 = vpop.f32.mrf.mxu0
    %v370 = vadd.f32 0.0, %v369
    %371 = vmatmul.f32.gmra.mxu0 %v291
    %v372 = vpop.f32.mrf.mxu0
    %v373 = vadd.f32 0.0, %v372
    %374 = vdwg.mxu0
    %375 = vmatpush.msra.mxu0 0.0
    %376 = vmatpush.msra.mxu0 0.0
    %377 = vmatpush.msra.mxu0 0.0
    %378 = vmatpush.msra.mxu0 0.0
    %379 = vmatpush.msra.mxu0 0.0
    %380 = vmatpush.msra.mxu0 0.0
    %381 = vmatpush.msra.mxu0 0.0
    %382 = vmatpush.msra.mxu0 0.0
    %383 = vmatpush.msra.mxu0 0.0
    %384 = vmatpush.msra.mxu0 0.0
    %385 = vmatpush.msra.mxu0 0.0
    %386 = vmatpush.msra.mxu0 0.0
    %387 = vmatpush.msra.mxu0 0.0
    %388 = vmatpush.msra.mxu0 0.0
    %389 = vmatpush.msra.mxu0 0.0
    %390 = vmatpush.msra.mxu0 %v54
    %391 = vmatmul.f32.gmra.mxu0 %v270
    %v392 = vpop.f32.mrf.mxu0
    %v393 = vadd.f32 0.0, %v392
    %394 = vmatmul.f32.gmra.mxu0 %v273
    %v395 = vpop.f32.mrf.mxu0
    %v396 = vadd.f32 0.0, %v395
    %397 = vmatmul.f32.gmra.mxu0 %v276
    %v398 = vpop.f32.mrf.mxu0
    %v399 = vadd.f32 0.0, %v398
    %400 = vmatmul.f32.gmra.mxu0 %v279
    %v401 = vpop.f32.mrf.mxu0
    %v402 = vadd.f32 0.0, %v401
    %403 = vmatmul.f32.gmra.mxu0 %v282
    %v404 = vpop.f32.mrf.mxu0
    %v405 = vadd.f32 0.0, %v404
    %406 = vmatmul.f32.gmra.mxu0 %v285
    %v407 = vpop.f32.mrf.mxu0
    %v408 = vadd.f32 0.0, %v407
    %409 = vmatmul.f32.gmra.mxu0 %v288
    %v410 = vpop.f32.mrf.mxu0
    %v411 = vadd.f32 0.0, %v410
    %412 = vmatmul.f32.gmra.mxu0 %v291
    %v413 = vpop.f32.mrf.mxu0
    %v414 = vadd.f32 0.0, %v413
    %415 = vdwg.mxu0
    %416 = vmatpush.msra.mxu0 %v100
    %417 = vmatpush.msra.mxu0 %v97
    %418 = vmatpush.msra.mxu0 %v94
    %419 = vmatpush.msra.mxu0 %v91
    %420 = vmatpush.msra.mxu0 %v88
    %421 = vmatpush.msra.mxu0 %v85
    %422 = vmatpush.msra.mxu0 %v82
    %423 = vmatpush.msra.mxu0 %v79
    %424 = vmatpush.msra.mxu0 %v76
    %425 = vmatpush.msra.mxu0 %v73
    %426 = vmatpush.msra.mxu0 %v70
    %427 = vmatpush.msra.mxu0 %v67
    %428 = vmatpush.msra.mxu0 %v64
    %429 = vmatpush.msra.mxu0 %v61
    %430 = vmatpush.msra.mxu0 %v58
    %431 = vmatpush.msra.mxu0 %v55
    %432 = vmatmul.f32.gmra.mxu0 0.0
    %v433 = vpop.f32.mrf.mxu0
    %v434 = vadd.f32 %v251, %v433
    %435 = vdwg.mxu0
    %436 = vmatpush.msra.mxu0 %v101
    %437 = vmatpush.msra.mxu0 %v98
    %438 = vmatpush.msra.mxu0 %v95
    %439 = vmatpush.msra.mxu0 %v92
    %440 = vmatpush.msra.mxu0 %v89
    %441 = vmatpush.msra.mxu0 %v86
    %442 = vmatpush.msra.mxu0 %v83
    %443 = vmatpush.msra.mxu0 %v80
    %444 = vmatpush.msra.mxu0 %v77
    %445 = vmatpush.msra.mxu0 %v74
    %446 = vmatpush.msra.mxu0 %v71
    %447 = vmatpush.msra.mxu0 %v68
    %448 = vmatpush.msra.mxu0 %v65
    %449 = vmatpush.msra.mxu0 %v62
    %450 = vmatpush.msra.mxu0 %v59
    %451 = vmatpush.msra.mxu0 %v56
    %452 = vmatmul.f32.gmra.mxu0 0.0
    %v453 = vpop.f32.mrf.mxu0
    %v454 = vadd.f32 %v252, %v453
    %455 = vdwg.mxu0
    %456 = vmatpush.msra.mxu0 %v102
    %457 = vmatpush.msra.mxu0 %v99
    %458 = vmatpush.msra.mxu0 %v96
    %459 = vmatpush.msra.mxu0 %v93
    %460 = vmatpush.msra.mxu0 %v90
    %461 = vmatpush.msra.mxu0 %v87
    %462 = vmatpush.msra.mxu0 %v84
    %463 = vmatpush.msra.mxu0 %v81
    %464 = vmatpush.msra.mxu0 %v78
    %465 = vmatpush.msra.mxu0 %v75
    %466 = vmatpush.msra.mxu0 %v72
    %467 = vmatpush.msra.mxu0 %v69
    %468 = vmatpush.msra.mxu0 %v66
    %469 = vmatpush.msra.mxu0 %v63
    %470 = vmatpush.msra.mxu0 %v60
    %471 = vmatpush.msra.mxu0 %v57
    %472 = vmatmul.f32.gmra.mxu0 0.0
    %v473 = vpop.f32.mrf.mxu0
    %v474 = vadd.f32 %v253, %v473
    %475 = vdwg.mxu0
    %v476 = vadd.f32 %v311, %v434
    %v477 = vxor.u32 %v476, 2147483648
    %v478 = vmul.f32 %v477, 1.442695
    %v479 = vpow.pop %v478
    %v480 = vadd.f32 %v479, 1.0
    %v481 = vrcp.pop %v480
    %v482 = vmul.f32 %v480, %v481
    %v483 = vsub.f32 1.0, %v482
    %v484 = vmul.f32 %v481, %v483
    %v485 = vadd.f32 %v481, %v484
    %vm486 = vweird.f32 %v480
    %vm487 = vweird.f32 %v481
    %vm488 = vmor %vm486, %vm487
    %v489 = vsel %vm488, %v481, %v485
    %v490 = vand.u32 2147483647, %v480
    %vm491 = vcmp.eq.f32.partialorder %v490, 8.507059e+37
    %v492 = vand.u32 %v480, 2147483648
    %v493 = vor.u32 1.1754944e-38, %v492
    %v494 = vsel %vm491, %v493, %v489
    %v495 = vmul.f32 1.0, %v494
    %v496 = vadd.f32 %v352, %v454
    %v497 = vxor.u32 %v496, 2147483648
    %v498 = vmul.f32 %v497, 1.442695
    %v499 = vpow.pop %v498
    %v500 = vadd.f32 %v499, 1.0
    %v501 = vrcp.pop %v500
    %v502 = vmul.f32 %v500, %v501
    %v503 = vsub.f32 1.0, %v502
    %v504 = vmul.f32 %v501, %v503
    %v505 = vadd.f32 %v501, %v504
    %vm506 = vweird.f32 %v500
    %vm507 = vweird.f32 %v501
    %vm508 = vmor %vm506, %vm507
    %v509 = vsel %vm508, %v501, %v505
    %v510 = vand.u32 2147483647, %v500
    %vm511 = vcmp.eq.f32.partialorder %v510, 8.507059e+37
    %v512 = vand.u32 %v500, 2147483648
    %v513 = vor.u32 1.1754944e-38, %v512
    %v514 = vsel %vm511, %v513, %v509
    %v515 = vmul.f32 1.0, %v514
    %v516 = vadd.f32 %v393, %v254
    %v517 = vmul.f32 %v495, %v474
    %v518 = vadd.f32 %v516, %v517
    %v519 = vtanh.pop %v518
    %v520 = vsub.f32 1.0, %v515
    %v521 = vmul.f32 %v520, %v519
    %v522 = vmul.f32 %v515, 0.0
    %v523 = vadd.f32 %v521, %v522
    %524 = vmatpush.msra.mxu0 %v100
    %525 = vmatpush.msra.mxu0 %v97
    %526 = vmatpush.msra.mxu0 %v94
    %527 = vmatpush.msra.mxu0 %v91
    %528 = vmatpush.msra.mxu0 %v88
    %529 = vmatpush.msra.mxu0 %v85
    %530 = vmatpush.msra.mxu0 %v82
    %531 = vmatpush.msra.mxu0 %v79
    %532 = vmatpush.msra.mxu0 %v76
    %533 = vmatpush.msra.mxu0 %v73
    %534 = vmatpush.msra.mxu0 %v70
    %535 = vmatpush.msra.mxu0 %v67
    %536 = vmatpush.msra.mxu0 %v64
    %537 = vmatpush.msra.mxu0 %v61
    %538 = vmatpush.msra.mxu0 %v58
    %539 = vmatpush.msra.mxu0 %v55
    %540 = vmatmul.f32.gmra.mxu0 %v523
    %v541 = vpop.f32.mrf.mxu0
    %v542 = vadd.f32 %v251, %v541
    %543 = vdwg.mxu0
    %544 = vmatpush.msra.mxu0 %v101
    %545 = vmatpush.msra.mxu0 %v98
    %546 = vmatpush.msra.mxu0 %v95
    %547 = vmatpush.msra.mxu0 %v92
    %548 = vmatpush.msra.mxu0 %v89
    %549 = vmatpush.msra.mxu0 %v86
    %550 = vmatpush.msra.mxu0 %v83
    %551 = vmatpush.msra.mxu0 %v80
    %552 = vmatpush.msra.mxu0 %v77
    %553 = vmatpush.msra.mxu0 %v74
    %554 = vmatpush.msra.mxu0 %v71
    %555 = vmatpush.msra.mxu0 %v68
    %556 = vmatpush.msra.mxu0 %v65
    %557 = vmatpush.msra.mxu0 %v62
    %558 = vmatpush.msra.mxu0 %v59
    %559 = vmatpush.msra.mxu0 %v56
    %560 = vmatmul.f32.gmra.mxu0 %v523
    %v561 = vpop.f32.mrf.mxu0
    %v562 = vadd.f32 %v252, %v561
    %563 = vdwg.mxu0
    %564 = vmatpush.msra.mxu0 %v102
    %565 = vmatpush.msra.mxu0 %v99
    %566 = vmatpush.msra.mxu0 %v96
    %567 = vmatpush.msra.mxu0 %v93
    %568 = vmatpush.msra.mxu0 %v90
    %569 = vmatpush.msra.mxu0 %v87
    %570 = vmatpush.msra.mxu0 %v84
    %571 = vmatpush.msra.mxu0 %v81
    %572 = vmatpush.msra.mxu0 %v78
    %573 = vmatpush.msra.mxu0 %v75
    %574 = vmatpush.msra.mxu0 %v72
    %575 = vmatpush.msra.mxu0 %v69
    %576 = vmatpush.msra.mxu0 %v66
    %577 = vmatpush.msra.mxu0 %v63
    %578 = vmatpush.msra.mxu0 %v60
    %579 = vmatpush.msra.mxu0 %v57
    %580 = vmatmul.f32.gmra.mxu0 %v523
    %v581 = vpop.f32.mrf.mxu0
    %v582 = vadd.f32 %v253, %v581
    %583 = vdwg.mxu0
    %v584 = vadd.f32 %v314, %v542
    %v585 = vxor.u32 %v584, 2147483648
    %v586 = vmul.f32 %v585, 1.442695
    %v587 = vpow.pop %v586
    %v588 = vadd.f32 %v587, 1.0
    %v589 = vrcp.pop %v588
    %v590 = vmul.f32 %v588, %v589
    %v591 = vsub.f32 1.0, %v590
    %v592 = vmul.f32 %v589, %v591
    %v593 = vadd.f32 %v589, %v592
    %vm594 = vweird.f32 %v588
    %vm595 = vweird.f32 %v589
    %vm596 = vmor %vm594, %vm595
    %v597 = vsel %vm596, %v589, %v593
    %v598 = vand.u32 2147483647, %v588
    %vm599 = vcmp.eq.f32.partialorder %v598, 8.507059e+37
    %v600 = vand.u32 %v588, 2147483648
    %v601 = vor.u32 1.1754944e-38, %v600
    %v602 = vsel %vm599, %v601, %v597
    %v603 = vmul.f32 1.0, %v602
    %v604 = vadd.f32 %v355, %v562
    %v605 = vxor.u32 %v604, 2147483648
    %v606 = vmul.f32 %v605, 1.442695
    %v607 = vpow.pop %v606
    %v608 = vadd.f32 %v607, 1.0
    %v609 = vrcp.pop %v608
    %v610 = vmul.f32 %v608, %v609
    %v611 = vsub.f32 1.0, %v610
    %v612 = vmul.f32 %v609, %v611
    %v613 = vadd.f32 %v609, %v612
    %vm614 = vweird.f32 %v608
    %vm615 = vweird.f32 %v609
    %vm616 = vmor %vm614, %vm615
    %v617 = vsel %vm616, %v609, %v613
    %v618 = vand.u32 2147483647, %v608
    %vm619 = vcmp.eq.f32.partialorder %v618, 8.507059e+37
    %v620 = vand.u32 %v608, 2147483648
    %v621 = vor.u32 1.1754944e-38, %v620
    %v622 = vsel %vm619, %v621, %v617
    %v623 = vmul.f32 1.0, %v622
    %v624 = vadd.f32 %v396, %v254
    %v625 = vmul.f32 %v603, %v582
    %v626 = vadd.f32 %v624, %v625
    %v627 = vtanh.pop %v626
    %v628 = vsub.f32 1.0, %v623
    %v629 = vmul.f32 %v628, %v627
    %v630 = vmul.f32 %v623, %v523
    %v631 = vadd.f32 %v629, %v630
    %632 = vmatpush.msra.mxu0 %v100
    %633 = vmatpush.msra.mxu0 %v97
    %634 = vmatpush.msra.mxu0 %v94
    %635 = vmatpush.msra.mxu0 %v91
    %636 = vmatpush.msra.mxu0 %v88
    %637 = vmatpush.msra.mxu0 %v85
    %638 = vmatpush.msra.mxu0 %v82
    %639 = vmatpush.msra.mxu0 %v79
    %640 = vmatpush.msra.mxu0 %v76
    %641 = vmatpush.msra.mxu0 %v73
    %642 = vmatpush.msra.mxu0 %v70
    %643 = vmatpush.msra.mxu0 %v67
    %644 = vmatpush.msra.mxu0 %v64
    %645 = vmatpush.msra.mxu0 %v61
    %646 = vmatpush.msra.mxu0 %v58
    %647 = vmatpush.msra.mxu0 %v55
    %648 = vmatmul.f32.gmra.mxu0 %v631
    %v649 = vpop.f32.mrf.mxu0
    %v650 = vadd.f32 %v251, %v649
    %651 = vdwg.mxu0
    %652 = vmatpush.msra.mxu0 %v101
    %653 = vmatpush.msra.mxu0 %v98
    %654 = vmatpush.msra.mxu0 %v95
    %655 = vmatpush.msra.mxu0 %v92
    %656 = vmatpush.msra.mxu0 %v89
    %657 = vmatpush.msra.mxu0 %v86
    %658 = vmatpush.msra.mxu0 %v83
    %659 = vmatpush.msra.mxu0 %v80
    %660 = vmatpush.msra.mxu0 %v77
    %661 = vmatpush.msra.mxu0 %v74
    %662 = vmatpush.msra.mxu0 %v71
    %663 = vmatpush.msra.mxu0 %v68
    %664 = vmatpush.msra.mxu0 %v65
    %665 = vmatpush.msra.mxu0 %v62
    %666 = vmatpush.msra.mxu0 %v59
    %667 = vmatpush.msra.mxu0 %v56
    %668 = vmatmul.f32.gmra.mxu0 %v631
    %v669 = vpop.f32.mrf.mxu0
    %v670 = vadd.f32 %v252, %v669
    %671 = vdwg.mxu0
    %672 = vmatpush.msra.mxu0 %v102
    %673 = vmatpush.msra.mxu0 %v99
    %674 = vmatpush.msra.mxu0 %v96
    %675 = vmatpush.msra.mxu0 %v93
    %676 = vmatpush.msra.mxu0 %v90
    %677 = vmatpush.msra.mxu0 %v87
    %678 = vmatpush.msra.mxu0 %v84
    %679 = vmatpush.msra.mxu0 %v81
    %680 = vmatpush.msra.mxu0 %v78
    %681 = vmatpush.msra.mxu0 %v75
    %682 = vmatpush.msra.mxu0 %v72
    %683 = vmatpush.msra.mxu0 %v69
    %684 = vmatpush.msra.mxu0 %v66
    %685 = vmatpush.msra.mxu0 %v63
    %686 = vmatpush.msra.mxu0 %v60
    %687 = vmatpush.msra.mxu0 %v57
    %688 = vmatmul.f32.gmra.mxu0 %v631
    %v689 = vpop.f32.mrf.mxu0
    %v690 = vadd.f32 %v253, %v689
    %691 = vdwg.mxu0
    %v692 = vadd.f32 %v317, %v650
    %v693 = vxor.u32 %v692, 2147483648
    %v694 = vmul.f32 %v693, 1.442695
    %v695 = vpow.pop %v694
    %v696 = vadd.f32 %v695, 1.0
    %v697 = vrcp.pop %v696
    %v698 = vmul.f32 %v696, %v697
    %v699 = vsub.f32 1.0, %v698
    %v700 = vmul.f32 %v697, %v699
    %v701 = vadd.f32 %v697, %v700
    %vm702 = vweird.f32 %v696
    %vm703 = vweird.f32 %v697
    %vm704 = vmor %vm702, %vm703
    %v705 = vsel %vm704, %v697, %v701
    %v706 = vand.u32 2147483647, %v696
    %vm707 = vcmp.eq.f32.partialorder %v706, 8.507059e+37
    %v708 = vand.u32 %v696, 2147483648
    %v709 = vor.u32 1.1754944e-38, %v708
    %v710 = vsel %vm707, %v709, %v705
    %v711 = vmul.f32 1.0, %v710
    %v712 = vadd.f32 %v358, %v670
    %v713 = vxor.u32 %v712, 2147483648
    %v714 = vmul.f32 %v713, 1.442695
    %v715 = vpow.pop %v714
    %v716 = vadd.f32 %v715, 1.0
    %v717 = vrcp.pop %v716
    %v718 = vmul.f32 %v716, %v717
    %v719 = vsub.f32 1.0, %v718
    %v720 = vmul.f32 %v717, %v719
    %v721 = vadd.f32 %v717, %v720
    %vm722 = vweird.f32 %v716
    %vm723 = vweird.f32 %v717
    %vm724 = vmor %vm722, %vm723
    %v725 = vsel %vm724, %v717, %v721
    %v726 = vand.u32 2147483647, %v716
    %vm727 = vcmp.eq.f32.partialorder %v726, 8.507059e+37
    %v728 = vand.u32 %v716, 2147483648
    %v729 = vor.u32 1.1754944e-38, %v728
    %v730 = vsel %vm727, %v729, %v725
    %v731 = vmul.f32 1.0, %v730
    %v732 = vadd.f32 %v399, %v254
    %v733 = vmul.f32 %v711, %v690
    %v734 = vadd.f32 %v732, %v733
    %v735 = vtanh.pop %v734
    %v736 = vsub.f32 1.0, %v731
    %v737 = vmul.f32 %v736, %v735
    %v738 = vmul.f32 %v731, %v631
    %v739 = vadd.f32 %v737, %v738
    %740 = vmatpush.msra.mxu0 %v100
    %741 = vmatpush.msra.mxu0 %v97
    %742 = vmatpush.msra.mxu0 %v94
    %743 = vmatpush.msra.mxu0 %v91
    %744 = vmatpush.msra.mxu0 %v88
    %745 = vmatpush.msra.mxu0 %v85
    %746 = vmatpush.msra.mxu0 %v82
    %747 = vmatpush.msra.mxu0 %v79
    %748 = vmatpush.msra.mxu0 %v76
    %749 = vmatpush.msra.mxu0 %v73
    %750 = vmatpush.msra.mxu0 %v70
    %751 = vmatpush.msra.mxu0 %v67
    %752 = vmatpush.msra.mxu0 %v64
    %753 = vmatpush.msra.mxu0 %v61
    %754 = vmatpush.msra.mxu0 %v58
    %755 = vmatpush.msra.mxu0 %v55
    %756 = vmatmul.f32.gmra.mxu0 %v739
    %v757 = vpop.f32.mrf.mxu0
    %v758 = vadd.f32 %v251, %v757
    %759 = vdwg.mxu0
    %760 = vmatpush.msra.mxu0 %v101
    %761 = vmatpush.msra.mxu0 %v98
    %762 = vmatpush.msra.mxu0 %v95
    %763 = vmatpush.msra.mxu0 %v92
    %764 = vmatpush.msra.mxu0 %v89
    %765 = vmatpush.msra.mxu0 %v86
    %766 = vmatpush.msra.mxu0 %v83
    %767 = vmatpush.msra.mxu0 %v80
    %768 = vmatpush.msra.mxu0 %v77
    %769 = vmatpush.msra.mxu0 %v74
    %770 = vmatpush.msra.mxu0 %v71
    %771 = vmatpush.msra.mxu0 %v68
    %772 = vmatpush.msra.mxu0 %v65
    %773 = vmatpush.msra.mxu0 %v62
    %774 = vmatpush.msra.mxu0 %v59
    %775 = vmatpush.msra.mxu0 %v56
    %776 = vmatmul.f32.gmra.mxu0 %v739
    %v777 = vpop.f32.mrf.mxu0
    %v778 = vadd.f32 %v252, %v777
    %779 = vdwg.mxu0
    %780 = vmatpush.msra.mxu0 %v102
    %781 = vmatpush.msra.mxu0 %v99
    %782 = vmatpush.msra.mxu0 %v96
    %783 = vmatpush.msra.mxu0 %v93
    %784 = vmatpush.msra.mxu0 %v90
    %785 = vmatpush.msra.mxu0 %v87
    %786 = vmatpush.msra.mxu0 %v84
    %787 = vmatpush.msra.mxu0 %v81
    %788 = vmatpush.msra.mxu0 %v78
    %789 = vmatpush.msra.mxu0 %v75
    %790 = vmatpush.msra.mxu0 %v72
    %791 = vmatpush.msra.mxu0 %v69
    %792 = vmatpush.msra.mxu0 %v66
    %793 = vmatpush.msra.mxu0 %v63
    %794 = vmatpush.msra.mxu0 %v60
    %795 = vmatpush.msra.mxu0 %v57
    %796 = vmatmul.f32.gmra.mxu0 %v739
    %v797 = vpop.f32.mrf.mxu0
    %v798 = vadd.f32 %v253, %v797
    %799 = vdwg.mxu0
    %v800 = vadd.f32 %v320, %v758
    %v801 = vxor.u32 %v800, 2147483648
    %v802 = vmul.f32 %v801, 1.442695
    %v803 = vpow.pop %v802
    %v804 = vadd.f32 %v803, 1.0
    %v805 = vrcp.pop %v804
    %v806 = vmul.f32 %v804, %v805
    %v807 = vsub.f32 1.0, %v806
    %v808 = vmul.f32 %v805, %v807
    %v809 = vadd.f32 %v805, %v808
    %vm810 = vweird.f32 %v804
    %vm811 = vweird.f32 %v805
    %vm812 = vmor %vm810, %vm811
    %v813 = vsel %vm812, %v805, %v809
    %v814 = vand.u32 2147483647, %v804
    %vm815 = vcmp.eq.f32.partialorder %v814, 8.507059e+37
    %v816 = vand.u32 %v804, 2147483648
    %v817 = vor.u32 1.1754944e-38, %v816
    %v818 = vsel %vm815, %v817, %v813
    %v819 = vmul.f32 1.0, %v818
    %v820 = vadd.f32 %v361, %v778
    %v821 = vxor.u32 %v820, 2147483648
    %v822 = vmul.f32 %v821, 1.442695
    %v823 = vpow.pop %v822
    %v824 = vadd.f32 %v823, 1.0
    %v825 = vrcp.pop %v824
    %v826 = vmul.f32 %v824, %v825
    %v827 = vsub.f32 1.0, %v826
    %v828 = vmul.f32 %v825, %v827
    %v829 = vadd.f32 %v825, %v828
    %vm830 = vweird.f32 %v824
    %vm831 = vweird.f32 %v825
    %vm832 = vmor %vm830, %vm831
    %v833 = vsel %vm832, %v825, %v829
    %v834 = vand.u32 2147483647, %v824
    %vm835 = vcmp.eq.f32.partialorder %v834, 8.507059e+37
    %v836 = vand.u32 %v824, 2147483648
    %v837 = vor.u32 1.1754944e-38, %v836
    %v838 = vsel %vm835, %v837, %v833
    %v839 = vmul.f32 1.0, %v838
    %v840 = vadd.f32 %v402, %v254
    %v841 = vmul.f32 %v819, %v798
    %v842 = vadd.f32 %v840, %v841
    %v843 = vtanh.pop %v842
    %v844 = vsub.f32 1.0, %v839
    %v845 = vmul.f32 %v844, %v843
    %v846 = vmul.f32 %v839, %v739
    %v847 = vadd.f32 %v845, %v846
    %848 = vmatpush.msra.mxu0 %v100
    %849 = vmatpush.msra.mxu0 %v97
    %850 = vmatpush.msra.mxu0 %v94
    %851 = vmatpush.msra.mxu0 %v91
    %852 = vmatpush.msra.mxu0 %v88
    %853 = vmatpush.msra.mxu0 %v85
    %854 = vmatpush.msra.mxu0 %v82
    %855 = vmatpush.msra.mxu0 %v79
    %856 = vmatpush.msra.mxu0 %v76
    %857 = vmatpush.msra.mxu0 %v73
    %858 = vmatpush.msra.mxu0 %v70
    %859 = vmatpush.msra.mxu0 %v67
    %860 = vmatpush.msra.mxu0 %v64
    %861 = vmatpush.msra.mxu0 %v61
    %862 = vmatpush.msra.mxu0 %v58
    %863 = vmatpush.msra.mxu0 %v55
    %864 = vmatmul.f32.gmra.mxu0 %v847
    %v865 = vpop.f32.mrf.mxu0
    %v866 = vadd.f32 %v251, %v865
    %867 = vdwg.mxu0
    %868 = vmatpush.msra.mxu0 %v101
    %869 = vmatpush.msra.mxu0 %v98
    %870 = vmatpush.msra.mxu0 %v95
    %871 = vmatpush.msra.mxu0 %v92
    %872 = vmatpush.msra.mxu0 %v89
    %873 = vmatpush.msra.mxu0 %v86
    %874 = vmatpush.msra.mxu0 %v83
    %875 = vmatpush.msra.mxu0 %v80
    %876 = vmatpush.msra.mxu0 %v77
    %877 = vmatpush.msra.mxu0 %v74
    %878 = vmatpush.msra.mxu0 %v71
    %879 = vmatpush.msra.mxu0 %v68
    %880 = vmatpush.msra.mxu0 %v65
    %881 = vmatpush.msra.mxu0 %v62
    %882 = vmatpush.msra.mxu0 %v59
    %883 = vmatpush.msra.mxu0 %v56
    %884 = vmatmul.f32.gmra.mxu0 %v847
    %v885 = vpop.f32.mrf.mxu0
    %v886 = vadd.f32 %v252, %v885
    %887 = vdwg.mxu0
    %888 = vmatpush.msra.mxu0 %v102
    %889 = vmatpush.msra.mxu0 %v99
    %890 = vmatpush.msra.mxu0 %v96
    %891 = vmatpush.msra.mxu0 %v93
    %892 = vmatpush.msra.mxu0 %v90
    %893 = vmatpush.msra.mxu0 %v87
    %894 = vmatpush.msra.mxu0 %v84
    %895 = vmatpush.msra.mxu0 %v81
    %896 = vmatpush.msra.mxu0 %v78
    %897 = vmatpush.msra.mxu0 %v75
    %898 = vmatpush.msra.mxu0 %v72
    %899 = vmatpush.msra.mxu0 %v69
    %900 = vmatpush.msra.mxu0 %v66
    %901 = vmatpush.msra.mxu0 %v63
    %902 = vmatpush.msra.mxu0 %v60
    %903 = vmatpush.msra.mxu0 %v57
    %904 = vmatmul.f32.gmra.mxu0 %v847
    %v905 = vpop.f32.mrf.mxu0
    %v906 = vadd.f32 %v253, %v905
    %907 = vdwg.mxu0
    %v908 = vadd.f32 %v323, %v866
    %v909 = vxor.u32 %v908, 2147483648
    %v910 = vmul.f32 %v909, 1.442695
    %v911 = vpow.pop %v910
    %v912 = vadd.f32 %v911, 1.0
    %v913 = vrcp.pop %v912
    %v914 = vmul.f32 %v912, %v913
    %v915 = vsub.f32 1.0, %v914
    %v916 = vmul.f32 %v913, %v915
    %v917 = vadd.f32 %v913, %v916
    %vm918 = vweird.f32 %v912
    %vm919 = vweird.f32 %v913
    %vm920 = vmor %vm918, %vm919
    %v921 = vsel %vm920, %v913, %v917
    %v922 = vand.u32 2147483647, %v912
    %vm923 = vcmp.eq.f32.partialorder %v922, 8.507059e+37
    %v924 = vand.u32 %v912, 2147483648
    %v925 = vor.u32 1.1754944e-38, %v924
    %v926 = vsel %vm923, %v925, %v921
    %v927 = vmul.f32 1.0, %v926
    %v928 = vadd.f32 %v364, %v886
    %v929 = vxor.u32 %v928, 2147483648
    %v930 = vmul.f32 %v929, 1.442695
    %v931 = vpow.pop %v930
    %v932 = vadd.f32 %v931, 1.0
    %v933 = vrcp.pop %v932
    %v934 = vmul.f32 %v932, %v933
    %v935 = vsub.f32 1.0, %v934
    %v936 = vmul.f32 %v933, %v935
    %v937 = vadd.f32 %v933, %v936
    %vm938 = vweird.f32 %v932
    %vm939 = vweird.f32 %v933
    %vm940 = vmor %vm938, %vm939
    %v941 = vsel %vm940, %v933, %v937
    %v942 = vand.u32 2147483647, %v932
    %vm943 = vcmp.eq.f32.partialorder %v942, 8.507059e+37
    %v944 = vand.u32 %v932, 2147483648
    %v945 = vor.u32 1.1754944e-38, %v944
    %v946 = vsel %vm943, %v945, %v941
    %v947 = vmul.f32 1.0, %v946
    %v948 = vadd.f32 %v405, %v254
    %v949 = vmul.f32 %v927, %v906
    %v950 = vadd.f32 %v948, %v949
    %v951 = vtanh.pop %v950
    %v952 = vsub.f32 1.0, %v947
    %v953 = vmul.f32 %v952, %v951
    %v954 = vmul.f32 %v947, %v847
    %v955 = vadd.f32 %v953, %v954
    %956 = vmatpush.msra.mxu0 %v100
    %957 = vmatpush.msra.mxu0 %v97
    %958 = vmatpush.msra.mxu0 %v94
    %959 = vmatpush.msra.mxu0 %v91
    %960 = vmatpush.msra.mxu0 %v88
    %961 = vmatpush.msra.mxu0 %v85
    %962 = vmatpush.msra.mxu0 %v82
    %963 = vmatpush.msra.mxu0 %v79
    %964 = vmatpush.msra.mxu0 %v76
    %965 = vmatpush.msra.mxu0 %v73
    %966 = vmatpush.msra.mxu0 %v70
    %967 = vmatpush.msra.mxu0 %v67
    %968 = vmatpush.msra.mxu0 %v64
    %969 = vmatpush.msra.mxu0 %v61
    %970 = vmatpush.msra.mxu0 %v58
    %971 = vmatpush.msra.mxu0 %v55
    %972 = vmatmul.f32.gmra.mxu0 %v955
    %v973 = vpop.f32.mrf.mxu0
    %v974 = vadd.f32 %v251, %v973
    %975 = vdwg.mxu0
    %976 = vmatpush.msra.mxu0 %v101
    %977 = vmatpush.msra.mxu0 %v98
    %978 = vmatpush.msra.mxu0 %v95
    %979 = vmatpush.msra.mxu0 %v92
    %980 = vmatpush.msra.mxu0 %v89
    %981 = vmatpush.msra.mxu0 %v86
    %982 = vmatpush.msra.mxu0 %v83
    %983 = vmatpush.msra.mxu0 %v80
    %984 = vmatpush.msra.mxu0 %v77
    %985 = vmatpush.msra.mxu0 %v74
    %986 = vmatpush.msra.mxu0 %v71
    %987 = vmatpush.msra.mxu0 %v68
    %988 = vmatpush.msra.mxu0 %v65
    %989 = vmatpush.msra.mxu0 %v62
    %990 = vmatpush.msra.mxu0 %v59
    %991 = vmatpush.msra.mxu0 %v56
    %992 = vmatmul.f32.gmra.mxu0 %v955
    %v993 = vpop.f32.mrf.mxu0
    %v994 = vadd.f32 %v252, %v993
    %995 = vdwg.mxu0
    %996 = vmatpush.msra.mxu0 %v102
    %997 = vmatpush.msra.mxu0 %v99
    %998 = vmatpush.msra.mxu0 %v96
    %999 = vmatpush.msra.mxu0 %v93
    %1000 = vmatpush.msra.mxu0 %v90
    %1001 = vmatpush.msra.mxu0 %v87
    %1002 = vmatpush.msra.mxu0 %v84
    %1003 = vmatpush.msra.mxu0 %v81
    %1004 = vmatpush.msra.mxu0 %v78
    %1005 = vmatpush.msra.mxu0 %v75
    %1006 = vmatpush.msra.mxu0 %v72
    %1007 = vmatpush.msra.mxu0 %v69
    %1008 = vmatpush.msra.mxu0 %v66
    %1009 = vmatpush.msra.mxu0 %v63
    %1010 = vmatpush.msra.mxu0 %v60
    %1011 = vmatpush.msra.mxu0 %v57
    %1012 = vmatmul.f32.gmra.mxu0 %v955
    %v1013 = vpop.f32.mrf.mxu0
    %v1014 = vadd.f32 %v253, %v1013
    %1015 = vdwg.mxu0
    %v1016 = vadd.f32 %v326, %v974
    %v1017 = vxor.u32 %v1016, 2147483648
    %v1018 = vmul.f32 %v1017, 1.442695
    %v1019 = vpow.pop %v1018
    %v1020 = vadd.f32 %v1019, 1.0
    %v1021 = vrcp.pop %v1020
    %v1022 = vmul.f32 %v1020, %v1021
    %v1023 = vsub.f32 1.0, %v1022
    %v1024 = vmul.f32 %v1021, %v1023
    %v1025 = vadd.f32 %v1021, %v1024
    %vm1026 = vweird.f32 %v1020
    %vm1027 = vweird.f32 %v1021
    %vm1028 = vmor %vm1026, %vm1027
    %v1029 = vsel %vm1028, %v1021, %v1025
    %v1030 = vand.u32 2147483647, %v1020
    %vm1031 = vcmp.eq.f32.partialorder %v1030, 8.507059e+37
    %v1032 = vand.u32 %v1020, 2147483648
    %v1033 = vor.u32 1.1754944e-38, %v1032
    %v1034 = vsel %vm1031, %v1033, %v1029
    %v1035 = vmul.f32 1.0, %v1034
    %v1036 = vadd.f32 %v367, %v994
    %v1037 = vxor.u32 %v1036, 2147483648
    %v1038 = vmul.f32 %v1037, 1.442695
    %v1039 = vpow.pop %v1038
    %v1040 = vadd.f32 %v1039, 1.0
    %v1041 = vrcp.pop %v1040
    %v1042 = vmul.f32 %v1040, %v1041
    %v1043 = vsub.f32 1.0, %v1042
    %v1044 = vmul.f32 %v1041, %v1043
    %v1045 = vadd.f32 %v1041, %v1044
    %vm1046 = vweird.f32 %v1040
    %vm1047 = vweird.f32 %v1041
    %vm1048 = vmor %vm1046, %vm1047
    %v1049 = vsel %vm1048, %v1041, %v1045
    %v1050 = vand.u32 2147483647, %v1040
    %vm1051 = vcmp.eq.f32.partialorder %v1050, 8.507059e+37
    %v1052 = vand.u32 %v1040, 2147483648
    %v1053 = vor.u32 1.1754944e-38, %v1052
    %v1054 = vsel %vm1051, %v1053, %v1049
    %v1055 = vmul.f32 1.0, %v1054
    %v1056 = vadd.f32 %v408, %v254
    %v1057 = vmul.f32 %v1035, %v1014
    %v1058 = vadd.f32 %v1056, %v1057
    %v1059 = vtanh.pop %v1058
    %v1060 = vsub.f32 1.0, %v1055
    %v1061 = vmul.f32 %v1060, %v1059
    %v1062 = vmul.f32 %v1055, %v955
    %v1063 = vadd.f32 %v1061, %v1062
    %1064 = vmatpush.msra.mxu0 %v100
    %1065 = vmatpush.msra.mxu0 %v97
    %1066 = vmatpush.msra.mxu0 %v94
    %1067 = vmatpush.msra.mxu0 %v91
    %1068 = vmatpush.msra.mxu0 %v88
    %1069 = vmatpush.msra.mxu0 %v85
    %1070 = vmatpush.msra.mxu0 %v82
    %1071 = vmatpush.msra.mxu0 %v79
    %1072 = vmatpush.msra.mxu0 %v76
    %1073 = vmatpush.msra.mxu0 %v73
    %1074 = vmatpush.msra.mxu0 %v70
    %1075 = vmatpush.msra.mxu0 %v67
    %1076 = vmatpush.msra.mxu0 %v64
    %1077 = vmatpush.msra.mxu0 %v61
    %1078 = vmatpush.msra.mxu0 %v58
    %1079 = vmatpush.msra.mxu0 %v55
    %1080 = vmatmul.f32.gmra.mxu0 %v1063
    %v1081 = vpop.f32.mrf.mxu0
    %v1082 = vadd.f32 %v251, %v1081
    %1083 = vdwg.mxu0
    %1084 = vmatpush.msra.mxu0 %v101
    %1085 = vmatpush.msra.mxu0 %v98
    %1086 = vmatpush.msra.mxu0 %v95
    %1087 = vmatpush.msra.mxu0 %v92
    %1088 = vmatpush.msra.mxu0 %v89
    %1089 = vmatpush.msra.mxu0 %v86
    %1090 = vmatpush.msra.mxu0 %v83
    %1091 = vmatpush.msra.mxu0 %v80
    %1092 = vmatpush.msra.mxu0 %v77
    %1093 = vmatpush.msra.mxu0 %v74
    %1094 = vmatpush.msra.mxu0 %v71
    %1095 = vmatpush.msra.mxu0 %v68
    %1096 = vmatpush.msra.mxu0 %v65
    %1097 = vmatpush.msra.mxu0 %v62
    %1098 = vmatpush.msra.mxu0 %v59
    %1099 = vmatpush.msra.mxu0 %v56
    %1100 = vmatmul.f32.gmra.mxu0 %v1063
    %v1101 = vpop.f32.mrf.mxu0
    %v1102 = vadd.f32 %v252, %v1101
    %1103 = vdwg.mxu0
    %1104 = vmatpush.msra.mxu0 %v102
    %1105 = vmatpush.msra.mxu0 %v99
    %1106 = vmatpush.msra.mxu0 %v96
    %1107 = vmatpush.msra.mxu0 %v93
    %1108 = vmatpush.msra.mxu0 %v90
    %1109 = vmatpush.msra.mxu0 %v87
    %1110 = vmatpush.msra.mxu0 %v84
    %1111 = vmatpush.msra.mxu0 %v81
    %1112 = vmatpush.msra.mxu0 %v78
    %1113 = vmatpush.msra.mxu0 %v75
    %1114 = vmatpush.msra.mxu0 %v72
    %1115 = vmatpush.msra.mxu0 %v69
    %1116 = vmatpush.msra.mxu0 %v66
    %1117 = vmatpush.msra.mxu0 %v63
    %1118 = vmatpush.msra.mxu0 %v60
    %1119 = vmatpush.msra.mxu0 %v57
    %1120 = vmatmul.f32.gmra.mxu0 %v1063
    %v1121 = vpop.f32.mrf.mxu0
    %v1122 = vadd.f32 %v253, %v1121
    %1123 = vdwg.mxu0
    %v1124 = vadd.f32 %v329, %v1082
    %v1125 = vxor.u32 %v1124, 2147483648
    %v1126 = vmul.f32 %v1125, 1.442695
    %v1127 = vpow.pop %v1126
    %v1128 = vadd.f32 %v1127, 1.0
    %v1129 = vrcp.pop %v1128
    %v1130 = vmul.f32 %v1128, %v1129
    %v1131 = vsub.f32 1.0, %v1130
    %v1132 = vmul.f32 %v1129, %v1131
    %v1133 = vadd.f32 %v1129, %v1132
    %vm1134 = vweird.f32 %v1128
    %vm1135 = vweird.f32 %v1129
    %vm1136 = vmor %vm1134, %vm1135
    %v1137 = vsel %vm1136, %v1129, %v1133
    %v1138 = vand.u32 2147483647, %v1128
    %vm1139 = vcmp.eq.f32.partialorder %v1138, 8.507059e+37
    %v1140 = vand.u32 %v1128, 2147483648
    %v1141 = vor.u32 1.1754944e-38, %v1140
    %v1142 = vsel %vm1139, %v1141, %v1137
    %v1143 = vmul.f32 1.0, %v1142
    %v1144 = vadd.f32 %v370, %v1102
    %v1145 = vxor.u32 %v1144, 2147483648
    %v1146 = vmul.f32 %v1145, 1.442695
    %v1147 = vpow.pop %v1146
    %v1148 = vadd.f32 %v1147, 1.0
    %v1149 = vrcp.pop %v1148
    %v1150 = vmul.f32 %v1148, %v1149
    %v1151 = vsub.f32 1.0, %v1150
    %v1152 = vmul.f32 %v1149, %v1151
    %v1153 = vadd.f32 %v1149, %v1152
    %vm1154 = vweird.f32 %v1148
    %vm1155 = vweird.f32 %v1149
    %vm1156 = vmor %vm1154, %vm1155
    %v1157 = vsel %vm1156, %v1149, %v1153
    %v1158 = vand.u32 2147483647, %v1148
    %vm1159 = vcmp.eq.f32.partialorder %v1158, 8.507059e+37
    %v1160 = vand.u32 %v1148, 2147483648
    %v1161 = vor.u32 1.1754944e-38, %v1160
    %v1162 = vsel %vm1159, %v1161, %v1157
    %v1163 = vmul.f32 1.0, %v1162
    %v1164 = vadd.f32 %v411, %v254
    %v1165 = vmul.f32 %v1143, %v1122
    %v1166 = vadd.f32 %v1164, %v1165
    %v1167 = vtanh.pop %v1166
    %v1168 = vsub.f32 1.0, %v1163
    %v1169 = vmul.f32 %v1168, %v1167
    %v1170 = vmul.f32 %v1163, %v1063
    %v1171 = vadd.f32 %v1169, %v1170
    %1172 = vmatpush.msra.mxu0 %v100
    %1173 = vmatpush.msra.mxu0 %v97
    %1174 = vmatpush.msra.mxu0 %v94
    %1175 = vmatpush.msra.mxu0 %v91
    %1176 = vmatpush.msra.mxu0 %v88
    %1177 = vmatpush.msra.mxu0 %v85
    %1178 = vmatpush.msra.mxu0 %v82
    %1179 = vmatpush.msra.mxu0 %v79
    %1180 = vmatpush.msra.mxu0 %v76
    %1181 = vmatpush.msra.mxu0 %v73
    %1182 = vmatpush.msra.mxu0 %v70
    %1183 = vmatpush.msra.mxu0 %v67
    %1184 = vmatpush.msra.mxu0 %v64
    %1185 = vmatpush.msra.mxu0 %v61
    %1186 = vmatpush.msra.mxu0 %v58
    %1187 = vmatpush.msra.mxu0 %v55
    %1188 = vmatmul.f32.gmra.mxu0 %v1171
    %v1189 = vpop.f32.mrf.mxu0
    %v1190 = vadd.f32 %v251, %v1189
    %1191 = vdwg.mxu0
    %1192 = vmatpush.msra.mxu0 %v101
    %1193 = vmatpush.msra.mxu0 %v98
    %1194 = vmatpush.msra.mxu0 %v95
    %1195 = vmatpush.msra.mxu0 %v92
    %1196 = vmatpush.msra.mxu0 %v89
    %1197 = vmatpush.msra.mxu0 %v86
    %1198 = vmatpush.msra.mxu0 %v83
    %1199 = vmatpush.msra.mxu0 %v80
    %1200 = vmatpush.msra.mxu0 %v77
    %1201 = vmatpush.msra.mxu0 %v74
    %1202 = vmatpush.msra.mxu0 %v71
    %1203 = vmatpush.msra.mxu0 %v68
    %1204 = vmatpush.msra.mxu0 %v65
    %1205 = vmatpush.msra.mxu0 %v62
    %1206 = vmatpush.msra.mxu0 %v59
    %1207 = vmatpush.msra.mxu0 %v56
    %1208 = vmatmul.f32.gmra.mxu0 %v1171
    %v1209 = vpop.f32.mrf.mxu0
    %v1210 = vadd.f32 %v252, %v1209
    %1211 = vdwg.mxu0
    %1212 = vmatpush.msra.mxu0 %v102
    %1213 = vmatpush.msra.mxu0 %v99
    %1214 = vmatpush.msra.mxu0 %v96
    %1215 = vmatpush.msra.mxu0 %v93
    %1216 = vmatpush.msra.mxu0 %v90
    %1217 = vmatpush.msra.mxu0 %v87
    %1218 = vmatpush.msra.mxu0 %v84
    %1219 = vmatpush.msra.mxu0 %v81
    %1220 = vmatpush.msra.mxu0 %v78
    %1221 = vmatpush.msra.mxu0 %v75
    %1222 = vmatpush.msra.mxu0 %v72
    %1223 = vmatpush.msra.mxu0 %v69
    %1224 = vmatpush.msra.mxu0 %v66
    %1225 = vmatpush.msra.mxu0 %v63
    %1226 = vmatpush.msra.mxu0 %v60
    %1227 = vmatpush.msra.mxu0 %v57
    %1228 = vmatmul.f32.gmra.mxu0 %v1171
    %v1229 = vpop.f32.mrf.mxu0
    %v1230 = vadd.f32 %v253, %v1229
    %1231 = vdwg.mxu0
    %v1232 = vadd.f32 %v332, %v1190
    %v1233 = vxor.u32 %v1232, 2147483648
    %v1234 = vmul.f32 %v1233, 1.442695
    %v1235 = vpow.pop %v1234
    %v1236 = vadd.f32 %v1235, 1.0
    %v1237 = vrcp.pop %v1236
    %v1238 = vmul.f32 %v1236, %v1237
    %v1239 = vsub.f32 1.0, %v1238
    %v1240 = vmul.f32 %v1237, %v1239
    %v1241 = vadd.f32 %v1237, %v1240
    %vm1242 = vweird.f32 %v1236
    %vm1243 = vweird.f32 %v1237
    %vm1244 = vmor %vm1242, %vm1243
    %v1245 = vsel %vm1244, %v1237, %v1241
    %v1246 = vand.u32 2147483647, %v1236
    %vm1247 = vcmp.eq.f32.partialorder %v1246, 8.507059e+37
    %v1248 = vand.u32 %v1236, 2147483648
    %v1249 = vor.u32 1.1754944e-38, %v1248
    %v1250 = vsel %vm1247, %v1249, %v1245
    %v1251 = vmul.f32 1.0, %v1250
    %v1252 = vadd.f32 %v373, %v1210
    %v1253 = vxor.u32 %v1252, 2147483648
    %v1254 = vmul.f32 %v1253, 1.442695
    %v1255 = vpow.pop %v1254
    %v1256 = vadd.f32 %v1255, 1.0
    %v1257 = vrcp.pop %v1256
    %v1258 = vmul.f32 %v1256, %v1257
    %v1259 = vsub.f32 1.0, %v1258
    %v1260 = vmul.f32 %v1257, %v1259
    %v1261 = vadd.f32 %v1257, %v1260
    %vm1262 = vweird.f32 %v1256
    %vm1263 = vweird.f32 %v1257
    %vm1264 = vmor %vm1262, %vm1263
    %v1265 = vsel %vm1264, %v1257, %v1261
    %v1266 = vand.u32 2147483647, %v1256
    %vm1267 = vcmp.eq.f32.partialorder %v1266, 8.507059e+37
    %v1268 = vand.u32 %v1256, 2147483648
    %v1269 = vor.u32 1.1754944e-38, %v1268
    %v1270 = vsel %vm1267, %v1269, %v1265
    %v1271 = vmul.f32 1.0, %v1270
    %v1272 = vadd.f32 %v414, %v254
    %v1273 = vmul.f32 %v1251, %v1230
    %v1274 = vadd.f32 %v1272, %v1273
    %v1275 = vtanh.pop %v1274
    %v1276 = vsub.f32 1.0, %v1271
    %v1277 = vmul.f32 %v1276, %v1275
    %v1278 = vmul.f32 %v1271, %v1171
    %v1279 = vadd.f32 %v1277, %v1278
    %1280 = vmatpush.msra.mxu0 %v227
    %1281 = vmatpush.msra.mxu0 %v223
    %1282 = vmatpush.msra.mxu0 %v219
    %1283 = vmatpush.msra.mxu0 %v215
    %1284 = vmatpush.msra.mxu0 %v211
    %1285 = vmatpush.msra.mxu0 %v207
    %1286 = vmatpush.msra.mxu0 %v203
    %1287 = vmatpush.msra.mxu0 %v199
    %1288 = vmatpush.msra.mxu0 %v195
    %1289 = vmatpush.msra.mxu0 %v191
    %1290 = vmatpush.msra.mxu0 %v187
    %1291 = vmatpush.msra.mxu0 %v183
    %1292 = vmatpush.msra.mxu0 %v179
    %1293 = vmatpush.msra.mxu0 %v175
    %1294 = vmatpush.msra.mxu0 %v171
    %1295 = vmatpush.msra.mxu0 %v167
    %1296 = vmatmul.f32.gmra.mxu0 %v1279
    %v1297 = vpop.f32.mrf.mxu0
    %v1298 = vadd.f32 0.0, %v1297
    %1299 = vdwg.mxu0
    %1300 = vmatpush.msra.mxu0 %v228
    %1301 = vmatpush.msra.mxu0 %v224
    %1302 = vmatpush.msra.mxu0 %v220
    %1303 = vmatpush.msra.mxu0 %v216
    %1304 = vmatpush.msra.mxu0 %v212
    %1305 = vmatpush.msra.mxu0 %v208
    %1306 = vmatpush.msra.mxu0 %v204
    %1307 = vmatpush.msra.mxu0 %v200
    %1308 = vmatpush.msra.mxu0 %v196
    %1309 = vmatpush.msra.mxu0 %v192
    %1310 = vmatpush.msra.mxu0 %v188
    %1311 = vmatpush.msra.mxu0 %v184
    %1312 = vmatpush.msra.mxu0 %v180
    %1313 = vmatpush.msra.mxu0 %v176
    %1314 = vmatpush.msra.mxu0 %v172
    %1315 = vmatpush.msra.mxu0 %v168
    %1316 = vmatmul.f32.gmra.mxu0 %v1279
    %v1317 = vpop.f32.mrf.mxu0
    %v1318 = vadd.f32 0.0, %v1317
    %1319 = vdwg.mxu0
    %1320 = vmatpush.msra.mxu0 %v229
    %1321 = vmatpush.msra.mxu0 %v225
    %1322 = vmatpush.msra.mxu0 %v221
    %1323 = vmatpush.msra.mxu0 %v217
    %1324 = vmatpush.msra.mxu0 %v213
    %1325 = vmatpush.msra.mxu0 %v209
    %1326 = vmatpush.msra.mxu0 %v205
    %1327 = vmatpush.msra.mxu0 %v201
    %1328 = vmatpush.msra.mxu0 %v197
    %1329 = vmatpush.msra.mxu0 %v193
    %1330 = vmatpush.msra.mxu0 %v189
    %1331 = vmatpush.msra.mxu0 %v185
    %1332 = vmatpush.msra.mxu0 %v181
    %1333 = vmatpush.msra.mxu0 %v177
    %1334 = vmatpush.msra.mxu0 %v173
    %1335 = vmatpush.msra.mxu0 %v169
    %1336 = vmatmul.f32.gmra.mxu0 %v1279
    %v1337 = vpop.f32.mrf.mxu0
    %v1338 = vadd.f32 0.0, %v1337
    %1339 = vdwg.mxu0
    %1340 = vmatpush.msra.mxu0 %v230
    %1341 = vmatpush.msra.mxu0 %v226
    %1342 = vmatpush.msra.mxu0 %v222
    %1343 = vmatpush.msra.mxu0 %v218
    %1344 = vmatpush.msra.mxu0 %v214
    %1345 = vmatpush.msra.mxu0 %v210
    %1346 = vmatpush.msra.mxu0 %v206
    %1347 = vmatpush.msra.mxu0 %v202
    %1348 = vmatpush.msra.mxu0 %v198
    %1349 = vmatpush.msra.mxu0 %v194
    %1350 = vmatpush.msra.mxu0 %v190
    %1351 = vmatpush.msra.mxu0 %v186
    %1352 = vmatpush.msra.mxu0 %v182
    %1353 = vmatpush.msra.mxu0 %v178
    %1354 = vmatpush.msra.mxu0 %v174
    %1355 = vmatpush.msra.mxu0 %v170
    %1356 = vmatmul.f32.gmra.mxu0 %v1279
    %v1357 = vpop.f32.mrf.mxu0
    %v1358 = vadd.f32 0.0, %v1357
    %1359 = vdwg.mxu0
    %1360 = vmatpush.msra.mxu0 0.0
    %1361 = vmatpush.msra.mxu0 0.0
    %1362 = vmatpush.msra.mxu0 0.0
    %1363 = vmatpush.msra.mxu0 0.0
    %1364 = vmatpush.msra.mxu0 0.0
    %1365 = vmatpush.msra.mxu0 0.0
    %1366 = vmatpush.msra.mxu0 0.0
    %1367 = vmatpush.msra.mxu0 0.0
    %1368 = vmatpush.msra.mxu0 0.0
    %1369 = vmatpush.msra.mxu0 0.0
    %1370 = vmatpush.msra.mxu0 0.0
    %1371 = vmatpush.msra.mxu0 0.0
    %1372 = vmatpush.msra.mxu0 0.0
    %1373 = vmatpush.msra.mxu0 0.0
    %1374 = vmatpush.msra.mxu0 0.0
    %1375 = vmatpush.msra.mxu0 %v103
    %1376 = vmatmul.f32.gmra.mxu0 %v291
    %v1377 = vpop.f32.mrf.mxu0
    %v1378 = vadd.f32 %v1298, %v1377
    %1379 = vdwg.mxu0
    %1380 = vmatpush.msra.mxu0 0.0
    %1381 = vmatpush.msra.mxu0 0.0
    %1382 = vmatpush.msra.mxu0 0.0
    %1383 = vmatpush.msra.mxu0 0.0
    %1384 = vmatpush.msra.mxu0 0.0
    %1385 = vmatpush.msra.mxu0 0.0
    %1386 = vmatpush.msra.mxu0 0.0
    %1387 = vmatpush.msra.mxu0 0.0
    %1388 = vmatpush.msra.mxu0 0.0
    %1389 = vmatpush.msra.mxu0 0.0
    %1390 = vmatpush.msra.mxu0 0.0
    %1391 = vmatpush.msra.mxu0 0.0
    %1392 = vmatpush.msra.mxu0 0.0
    %1393 = vmatpush.msra.mxu0 0.0
    %1394 = vmatpush.msra.mxu0 0.0
    %1395 = vmatpush.msra.mxu0 %v104
    %1396 = vmatmul.f32.gmra.mxu0 %v291
    %v1397 = vpop.f32.mrf.mxu0
    %v1398 = vadd.f32 %v1318, %v1397
    %1399 = vdwg.mxu0
    %1400 = vmatpush.msra.mxu0 0.0
    %1401 = vmatpush.msra.mxu0 0.0
    %1402 = vmatpush.msra.mxu0 0.0
    %1403 = vmatpush.msra.mxu0 0.0
    %1404 = vmatpush.msra.mxu0 0.0
    %1405 = vmatpush.msra.mxu0 0.0
    %1406 = vmatpush.msra.mxu0 0.0
    %1407 = vmatpush.msra.mxu0 0.0
    %1408 = vmatpush.msra.mxu0 0.0
    %1409 = vmatpush.msra.mxu0 0.0
    %1410 = vmatpush.msra.mxu0 0.0
    %1411 = vmatpush.msra.mxu0 0.0
    %1412 = vmatpush.msra.mxu0 0.0
    %1413 = vmatpush.msra.mxu0 0.0
    %1414 = vmatpush.msra.mxu0 0.0
    %1415 = vmatpush.msra.mxu0 %v105
    %1416 = vmatmul.f32.gmra.mxu0 %v291
    %v1417 = vpop.f32.mrf.mxu0
    %v1418 = vadd.f32 %v1338, %v1417
    %1419 = vdwg.mxu0
    %1420 = vmatpush.msra.mxu0 0.0
    %1421 = vmatpush.msra.mxu0 0.0
    %1422 = vmatpush.msra.mxu0 0.0
    %1423 = vmatpush.msra.mxu0 0.0
    %1424 = vmatpush.msra.mxu0 0.0
    %1425 = vmatpush.msra.mxu0 0.0
    %1426 = vmatpush.msra.mxu0 0.0
    %1427 = vmatpush.msra.mxu0 0.0
    %1428 = vmatpush.msra.mxu0 0.0
    %1429 = vmatpush.msra.mxu0 0.0
    %1430 = vmatpush.msra.mxu0 0.0
    %1431 = vmatpush.msra.mxu0 0.0
    %1432 = vmatpush.msra.mxu0 0.0
    %1433 = vmatpush.msra.mxu0 0.0
    %1434 = vmatpush.msra.mxu0 0.0
    %1435 = vmatpush.msra.mxu0 %v106
    %1436 = vmatmul.f32.gmra.mxu0 %v291
    %v1437 = vpop.f32.mrf.mxu0
    %v1438 = vadd.f32 %v1358, %v1437
    %1439 = vdwg.mxu0
    %v1440 = vadd.f32 %v1378, %v255
    %v1441 = vadd.f32 %v1398, %v256
    %v1442 = vadd.f32 %v1418, %v257
    %v1443 = vadd.f32 %v1438, %v258
    %v1444 = vxor.u32 %v1440, 2147483648
    %v1445 = vmul.f32 %v1444, 1.442695
    %v1446 = vpow.pop %v1445
    %v1447 = vadd.f32 %v1446, 1.0
    %v1448 = vrcp.pop %v1447
    %v1449 = vmul.f32 %v1447, %v1448
    %v1450 = vsub.f32 1.0, %v1449
    %v1451 = vmul.f32 %v1448, %v1450
    %v1452 = vadd.f32 %v1448, %v1451
    %vm1453 = vweird.f32 %v1447
    %vm1454 = vweird.f32 %v1448
    %vm1455 = vmor %vm1453, %vm1454
    %v1456 = vsel %vm1455, %v1448, %v1452
    %v1457 = vand.u32 2147483647, %v1447
    %vm1458 = vcmp.eq.f32.partialorder %v1457, 8.507059e+37
    %v1459 = vand.u32 %v1447, 2147483648
    %v1460 = vor.u32 1.1754944e-38, %v1459
    %v1461 = vsel %vm1458, %v1460, %v1456
    %v1462 = vmul.f32 1.0, %v1461
    %v1463 = vxor.u32 %v1441, 2147483648
    %v1464 = vmul.f32 %v1463, 1.442695
    %v1465 = vpow.pop %v1464
    %v1466 = vadd.f32 %v1465, 1.0
    %v1467 = vrcp.pop %v1466
    %v1468 = vmul.f32 %v1466, %v1467
    %v1469 = vsub.f32 1.0, %v1468
    %v1470 = vmul.f32 %v1467, %v1469
    %v1471 = vadd.f32 %v1467, %v1470
    %vm1472 = vweird.f32 %v1466
    %vm1473 = vweird.f32 %v1467
    %vm1474 = vmor %vm1472, %vm1473
    %v1475 = vsel %vm1474, %v1467, %v1471
    %v1476 = vand.u32 2147483647, %v1466
    %vm1477 = vcmp.eq.f32.partialorder %v1476, 8.507059e+37
    %v1478 = vand.u32 %v1466, 2147483648
    %v1479 = vor.u32 1.1754944e-38, %v1478
    %v1480 = vsel %vm1477, %v1479, %v1475
    %v1481 = vmul.f32 1.0, %v1480
    %v1482 = vmul.f32 %v1462, %v1443
    %v1483 = vadd.f32 %v1442, %v1482
    %v1484 = vtanh.pop %v1483
    %v1485 = vsub.f32 1.0, %v1481
    %v1486 = vmul.f32 %v1485, %v1484
    %v1487 = vmul.f32 %v1481, %v1279
    %v1488 = vadd.f32 %v1486, %v1487
    %1489 = vmatpush.msra.mxu0 %v246
    %1490 = vmatpush.msra.mxu0 %v245
    %1491 = vmatpush.msra.mxu0 %v244
    %1492 = vmatpush.msra.mxu0 %v243
    %1493 = vmatpush.msra.mxu0 %v242
    %1494 = vmatpush.msra.mxu0 %v241
    %1495 = vmatpush.msra.mxu0 %v240
    %1496 = vmatpush.msra.mxu0 %v239
    %1497 = vmatpush.msra.mxu0 %v238
    %1498 = vmatpush.msra.mxu0 %v237
    %1499 = vmatpush.msra.mxu0 %v236
    %1500 = vmatpush.msra.mxu0 %v235
    %1501 = vmatpush.msra.mxu0 %v234
    %1502 = vmatpush.msra.mxu0 %v233
    %1503 = vmatpush.msra.mxu0 %v232
    %1504 = vmatpush.msra.mxu0 %v231
    %1505 = vmatmul.f32.gmra.mxu0 %v1488
    %v1506 = vpop.f32.mrf.mxu0
    %v1507 = vadd.f32 %v259, %v1506
    %1508 = vdwg.mxu0
    %1509 = vmatpush.msra.mxu0 %v163
    %1510 = vmatpush.msra.mxu0 %v159
    %1511 = vmatpush.msra.mxu0 %v155
    %1512 = vmatpush.msra.mxu0 %v151
    %1513 = vmatpush.msra.mxu0 %v147
    %1514 = vmatpush.msra.mxu0 %v143
    %1515 = vmatpush.msra.mxu0 %v139
    %1516 = vmatpush.msra.mxu0 %v135
    %1517 = vmatpush.msra.mxu0 %v131
    %1518 = vmatpush.msra.mxu0 %v127
    %1519 = vmatpush.msra.mxu0 %v123
    %1520 = vmatpush.msra.mxu0 %v119
    %1521 = vmatpush.msra.mxu0 %v115
    %1522 = vmatpush.msra.mxu0 %v111
    %1523 = vmatpush.msra.mxu0 %v107
    %1524 = vmatpush.msra.mxu0 %v103
    %1525 = vmatmul.f32.gmra.mxu0 %v1507
    %v1526 = vpop.f32.mrf.mxu0
    %v1527 = vadd.f32 %v255, %v1526
    %1528 = vdwg.mxu0
    %1529 = vmatpush.msra.mxu0 %v227
    %1530 = vmatpush.msra.mxu0 %v223
    %1531 = vmatpush.msra.mxu0 %v219
    %1532 = vmatpush.msra.mxu0 %v215
    %1533 = vmatpush.msra.mxu0 %v211
    %1534 = vmatpush.msra.mxu0 %v207
    %1535 = vmatpush.msra.mxu0 %v203
    %1536 = vmatpush.msra.mxu0 %v199
    %1537 = vmatpush.msra.mxu0 %v195
    %1538 = vmatpush.msra.mxu0 %v191
    %1539 = vmatpush.msra.mxu0 %v187
    %1540 = vmatpush.msra.mxu0 %v183
    %1541 = vmatpush.msra.mxu0 %v179
    %1542 = vmatpush.msra.mxu0 %v175
    %1543 = vmatpush.msra.mxu0 %v171
    %1544 = vmatpush.msra.mxu0 %v167
    %1545 = vmatmul.f32.gmra.mxu0 %v1488
    %v1546 = vpop.f32.mrf.mxu0
    %v1547 = vadd.f32 %v1527, %v1546
    %1548 = vdwg.mxu0
    %1549 = vmatpush.msra.mxu0 %v164
    %1550 = vmatpush.msra.mxu0 %v160
    %1551 = vmatpush.msra.mxu0 %v156
    %1552 = vmatpush.msra.mxu0 %v152
    %1553 = vmatpush.msra.mxu0 %v148
    %1554 = vmatpush.msra.mxu0 %v144
    %1555 = vmatpush.msra.mxu0 %v140
    %1556 = vmatpush.msra.mxu0 %v136
    %1557 = vmatpush.msra.mxu0 %v132
    %1558 = vmatpush.msra.mxu0 %v128
    %1559 = vmatpush.msra.mxu0 %v124
    %1560 = vmatpush.msra.mxu0 %v120
    %1561 = vmatpush.msra.mxu0 %v116
    %1562 = vmatpush.msra.mxu0 %v112
    %1563 = vmatpush.msra.mxu0 %v108
    %1564 = vmatpush.msra.mxu0 %v104
    %1565 = vmatmul.f32.gmra.mxu0 %v1507
    %v1566 = vpop.f32.mrf.mxu0
    %v1567 = vadd.f32 %v256, %v1566
    %1568 = vdwg.mxu0
    %1569 = vmatpush.msra.mxu0 %v228
    %1570 = vmatpush.msra.mxu0 %v224
    %1571 = vmatpush.msra.mxu0 %v220
    %1572 = vmatpush.msra.mxu0 %v216
    %1573 = vmatpush.msra.mxu0 %v212
    %1574 = vmatpush.msra.mxu0 %v208
    %1575 = vmatpush.msra.mxu0 %v204
    %1576 = vmatpush.msra.mxu0 %v200
    %1577 = vmatpush.msra.mxu0 %v196
    %1578 = vmatpush.msra.mxu0 %v192
    %1579 = vmatpush.msra.mxu0 %v188
    %1580 = vmatpush.msra.mxu0 %v184
    %1581 = vmatpush.msra.mxu0 %v180
    %1582 = vmatpush.msra.mxu0 %v176
    %1583 = vmatpush.msra.mxu0 %v172
    %1584 = vmatpush.msra.mxu0 %v168
    %1585 = vmatmul.f32.gmra.mxu0 %v1488
    %v1586 = vpop.f32.mrf.mxu0
    %v1587 = vadd.f32 %v1567, %v1586
    %1588 = vdwg.mxu0
    %1589 = vmatpush.msra.mxu0 %v165
    %1590 = vmatpush.msra.mxu0 %v161
    %1591 = vmatpush.msra.mxu0 %v157
    %1592 = vmatpush.msra.mxu0 %v153
    %1593 = vmatpush.msra.mxu0 %v149
    %1594 = vmatpush.msra.mxu0 %v145
    %1595 = vmatpush.msra.mxu0 %v141
    %1596 = vmatpush.msra.mxu0 %v137
    %1597 = vmatpush.msra.mxu0 %v133
    %1598 = vmatpush.msra.mxu0 %v129
    %1599 = vmatpush.msra.mxu0 %v125
    %1600 = vmatpush.msra.mxu0 %v121
    %1601 = vmatpush.msra.mxu0 %v117
    %1602 = vmatpush.msra.mxu0 %v113
    %1603 = vmatpush.msra.mxu0 %v109
    %1604 = vmatpush.msra.mxu0 %v105
    %1605 = vmatmul.f32.gmra.mxu0 %v1507
    %v1606 = vpop.f32.mrf.mxu0
    %v1607 = vadd.f32 %v257, %v1606
    %1608 = vdwg.mxu0
    %1609 = vmatpush.msra.mxu0 %v229
    %1610 = vmatpush.msra.mxu0 %v225
    %1611 = vmatpush.msra.mxu0 %v221
    %1612 = vmatpush.msra.mxu0 %v217
    %1613 = vmatpush.msra.mxu0 %v213
    %1614 = vmatpush.msra.mxu0 %v209
    %1615 = vmatpush.msra.mxu0 %v205
    %1616 = vmatpush.msra.mxu0 %v201
    %1617 = vmatpush.msra.mxu0 %v197
    %1618 = vmatpush.msra.mxu0 %v193
    %1619 = vmatpush.msra.mxu0 %v189
    %1620 = vmatpush.msra.mxu0 %v185
    %1621 = vmatpush.msra.mxu0 %v181
    %1622 = vmatpush.msra.mxu0 %v177
    %1623 = vmatpush.msra.mxu0 %v173
    %1624 = vmatpush.msra.mxu0 %v169
    %1625 = vmatmul.f32.gmra.mxu0 %v1488
    %v1626 = vpop.f32.mrf.mxu0
    %v1627 = vadd.f32 %v1607, %v1626
    %1628 = vdwg.mxu0
    %1629 = vmatpush.msra.mxu0 %v166
    %1630 = vmatpush.msra.mxu0 %v162
    %1631 = vmatpush.msra.mxu0 %v158
    %1632 = vmatpush.msra.mxu0 %v154
    %1633 = vmatpush.msra.mxu0 %v150
    %1634 = vmatpush.msra.mxu0 %v146
    %1635 = vmatpush.msra.mxu0 %v142
    %1636 = vmatpush.msra.mxu0 %v138
    %1637 = vmatpush.msra.mxu0 %v134
    %1638 = vmatpush.msra.mxu0 %v130
    %1639 = vmatpush.msra.mxu0 %v126
    %1640 = vmatpush.msra.mxu0 %v122
    %1641 = vmatpush.msra.mxu0 %v118
    %1642 = vmatpush.msra.mxu0 %v114
    %1643 = vmatpush.msra.mxu0 %v110
    %1644 = vmatpush.msra.mxu0 %v106
    %1645 = vmatmul.f32.gmra.mxu0 %v1507
    %v1646 = vpop.f32.mrf.mxu0
    %v1647 = vadd.f32 %v258, %v1646
    %1648 = vdwg.mxu0
    %1649 = vmatpush.msra.mxu0 %v230
    %1650 = vmatpush.msra.mxu0 %v226
    %1651 = vmatpush.msra.mxu0 %v222
    %1652 = vmatpush.msra.mxu0 %v218
    %1653 = vmatpush.msra.mxu0 %v214
    %1654 = vmatpush.msra.mxu0 %v210
    %1655 = vmatpush.msra.mxu0 %v206
    %1656 = vmatpush.msra.mxu0 %v202
    %1657 = vmatpush.msra.mxu0 %v198
    %1658 = vmatpush.msra.mxu0 %v194
    %1659 = vmatpush.msra.mxu0 %v190
    %1660 = vmatpush.msra.mxu0 %v186
    %1661 = vmatpush.msra.mxu0 %v182
    %1662 = vmatpush.msra.mxu0 %v178
    %1663 = vmatpush.msra.mxu0 %v174
    %1664 = vmatpush.msra.mxu0 %v170
    %1665 = vmatmul.f32.gmra.mxu0 %v1488
    %v1666 = vpop.f32.mrf.mxu0
    %v1667 = vadd.f32 %v1647, %v1666
    %1668 = vdwg.mxu0
    %v1669 = vxor.u32 %v1547, 2147483648
    %v1670 = vmul.f32 %v1669, 1.442695
    %v1671 = vpow.pop %v1670
    %v1672 = vadd.f32 %v1671, 1.0
    %v1673 = vrcp.pop %v1672
    %v1674 = vmul.f32 %v1672, %v1673
    %v1675 = vsub.f32 1.0, %v1674
    %v1676 = vmul.f32 %v1673, %v1675
    %v1677 = vadd.f32 %v1673, %v1676
    %vm1678 = vweird.f32 %v1672
    %vm1679 = vweird.f32 %v1673
    %vm1680 = vmor %vm1678, %vm1679
    %v1681 = vsel %vm1680, %v1673, %v1677
    %v1682 = vand.u32 2147483647, %v1672
    %vm1683 = vcmp.eq.f32.partialorder %v1682, 8.507059e+37
    %v1684 = vand.u32 %v1672, 2147483648
    %v1685 = vor.u32 1.1754944e-38, %v1684
    %v1686 = vsel %vm1683, %v1685, %v1681
    %v1687 = vmul.f32 1.0, %v1686
    %v1688 = vxor.u32 %v1587, 2147483648
    %v1689 = vmul.f32 %v1688, 1.442695
    %v1690 = vpow.pop %v1689
    %v1691 = vadd.f32 %v1690, 1.0
    %v1692 = vrcp.pop %v1691
    %v1693 = vmul.f32 %v1691, %v1692
    %v1694 = vsub.f32 1.0, %v1693
    %v1695 = vmul.f32 %v1692, %v1694
    %v1696 = vadd.f32 %v1692, %v1695
    %vm1697 = vweird.f32 %v1691
    %vm1698 = vweird.f32 %v1692
    %vm1699 = vmor %vm1697, %vm1698
    %v1700 = vsel %vm1699, %v1692, %v1696
    %v1701 = vand.u32 2147483647, %v1691
    %vm1702 = vcmp.eq.f32.partialorder %v1701, 8.507059e+37
    %v1703 = vand.u32 %v1691, 2147483648
    %v1704 = vor.u32 1.1754944e-38, %v1703
    %v1705 = vsel %vm1702, %v1704, %v1700
    %v1706 = vmul.f32 1.0, %v1705
    %v1707 = vmul.f32 %v1687, %v1667
    %v1708 = vadd.f32 %v1627, %v1707
    %v1709 = vtanh.pop %v1708
    %v1710 = vsub.f32 1.0, %v1706
    %v1711 = vmul.f32 %v1710, %v1709
    %v1712 = vmul.f32 %v1706, %v1488
    %v1713 = vadd.f32 %v1711, %v1712
    %1714 = vmatpush.msra.mxu0 %v246
    %1715 = vmatpush.msra.mxu0 %v245
    %1716 = vmatpush.msra.mxu0 %v244
    %1717 = vmatpush.msra.mxu0 %v243
    %1718 = vmatpush.msra.mxu0 %v242
    %1719 = vmatpush.msra.mxu0 %v241
    %1720 = vmatpush.msra.mxu0 %v240
    %1721 = vmatpush.msra.mxu0 %v239
    %1722 = vmatpush.msra.mxu0 %v238
    %1723 = vmatpush.msra.mxu0 %v237
    %1724 = vmatpush.msra.mxu0 %v236
    %1725 = vmatpush.msra.mxu0 %v235
    %1726 = vmatpush.msra.mxu0 %v234
    %1727 = vmatpush.msra.mxu0 %v233
    %1728 = vmatpush.msra.mxu0 %v232
    %1729 = vmatpush.msra.mxu0 %v231
    %1730 = vmatmul.f32.gmra.mxu0 %v1713
    %v1731 = vpop.f32.mrf.mxu0
    %v1732 = vadd.f32 %v259, %v1731
    %1733 = vdwg.mxu0
    %1734 = vmatpush.msra.mxu0 %v163
    %1735 = vmatpush.msra.mxu0 %v159
    %1736 = vmatpush.msra.mxu0 %v155
    %1737 = vmatpush.msra.mxu0 %v151
    %1738 = vmatpush.msra.mxu0 %v147
    %1739 = vmatpush.msra.mxu0 %v143
    %1740 = vmatpush.msra.mxu0 %v139
    %1741 = vmatpush.msra.mxu0 %v135
    %1742 = vmatpush.msra.mxu0 %v131
    %1743 = vmatpush.msra.mxu0 %v127
    %1744 = vmatpush.msra.mxu0 %v123
    %1745 = vmatpush.msra.mxu0 %v119
    %1746 = vmatpush.msra.mxu0 %v115
    %1747 = vmatpush.msra.mxu0 %v111
    %1748 = vmatpush.msra.mxu0 %v107
    %1749 = vmatpush.msra.mxu0 %v103
    %1750 = vmatmul.f32.gmra.mxu0 %v1732
    %v1751 = vpop.f32.mrf.mxu0
    %v1752 = vadd.f32 %v255, %v1751
    %1753 = vdwg.mxu0
    %1754 = vmatpush.msra.mxu0 %v227
    %1755 = vmatpush.msra.mxu0 %v223
    %1756 = vmatpush.msra.mxu0 %v219
    %1757 = vmatpush.msra.mxu0 %v215
    %1758 = vmatpush.msra.mxu0 %v211
    %1759 = vmatpush.msra.mxu0 %v207
    %1760 = vmatpush.msra.mxu0 %v203
    %1761 = vmatpush.msra.mxu0 %v199
    %1762 = vmatpush.msra.mxu0 %v195
    %1763 = vmatpush.msra.mxu0 %v191
    %1764 = vmatpush.msra.mxu0 %v187
    %1765 = vmatpush.msra.mxu0 %v183
    %1766 = vmatpush.msra.mxu0 %v179
    %1767 = vmatpush.msra.mxu0 %v175
    %1768 = vmatpush.msra.mxu0 %v171
    %1769 = vmatpush.msra.mxu0 %v167
    %1770 = vmatmul.f32.gmra.mxu0 %v1713
    %v1771 = vpop.f32.mrf.mxu0
    %v1772 = vadd.f32 %v1752, %v1771
    %1773 = vdwg.mxu0
    %1774 = vmatpush.msra.mxu0 %v164
    %1775 = vmatpush.msra.mxu0 %v160
    %1776 = vmatpush.msra.mxu0 %v156
    %1777 = vmatpush.msra.mxu0 %v152
    %1778 = vmatpush.msra.mxu0 %v148
    %1779 = vmatpush.msra.mxu0 %v144
    %1780 = vmatpush.msra.mxu0 %v140
    %1781 = vmatpush.msra.mxu0 %v136
    %1782 = vmatpush.msra.mxu0 %v132
    %1783 = vmatpush.msra.mxu0 %v128
    %1784 = vmatpush.msra.mxu0 %v124
    %1785 = vmatpush.msra.mxu0 %v120
    %1786 = vmatpush.msra.mxu0 %v116
    %1787 = vmatpush.msra.mxu0 %v112
    %1788 = vmatpush.msra.mxu0 %v108
    %1789 = vmatpush.msra.mxu0 %v104
    %1790 = vmatmul.f32.gmra.mxu0 %v1732
    %v1791 = vpop.f32.mrf.mxu0
    %v1792 = vadd.f32 %v256, %v1791
    %1793 = vdwg.mxu0
    %1794 = vmatpush.msra.mxu0 %v228
    %1795 = vmatpush.msra.mxu0 %v224
    %1796 = vmatpush.msra.mxu0 %v220
    %1797 = vmatpush.msra.mxu0 %v216
    %1798 = vmatpush.msra.mxu0 %v212
    %1799 = vmatpush.msra.mxu0 %v208
    %1800 = vmatpush.msra.mxu0 %v204
    %1801 = vmatpush.msra.mxu0 %v200
    %1802 = vmatpush.msra.mxu0 %v196
    %1803 = vmatpush.msra.mxu0 %v192
    %1804 = vmatpush.msra.mxu0 %v188
    %1805 = vmatpush.msra.mxu0 %v184
    %1806 = vmatpush.msra.mxu0 %v180
    %1807 = vmatpush.msra.mxu0 %v176
    %1808 = vmatpush.msra.mxu0 %v172
    %1809 = vmatpush.msra.mxu0 %v168
    %1810 = vmatmul.f32.gmra.mxu0 %v1713
    %v1811 = vpop.f32.mrf.mxu0
    %v1812 = vadd.f32 %v1792, %v1811
    %1813 = vdwg.mxu0
    %1814 = vmatpush.msra.mxu0 %v165
    %1815 = vmatpush.msra.mxu0 %v161
    %1816 = vmatpush.msra.mxu0 %v157
    %1817 = vmatpush.msra.mxu0 %v153
    %1818 = vmatpush.msra.mxu0 %v149
    %1819 = vmatpush.msra.mxu0 %v145
    %1820 = vmatpush.msra.mxu0 %v141
    %1821 = vmatpush.msra.mxu0 %v137
    %1822 = vmatpush.msra.mxu0 %v133
    %1823 = vmatpush.msra.mxu0 %v129
    %1824 = vmatpush.msra.mxu0 %v125
    %1825 = vmatpush.msra.mxu0 %v121
    %1826 = vmatpush.msra.mxu0 %v117
    %1827 = vmatpush.msra.mxu0 %v113
    %1828 = vmatpush.msra.mxu0 %v109
    %1829 = vmatpush.msra.mxu0 %v105
    %1830 = vmatmul.f32.gmra.mxu0 %v1732
    %v1831 = vpop.f32.mrf.mxu0
    %v1832 = vadd.f32 %v257, %v1831
    %1833 = vdwg.mxu0
    %1834 = vmatpush.msra.mxu0 %v229
    %1835 = vmatpush.msra.mxu0 %v225
    %1836 = vmatpush.msra.mxu0 %v221
    %1837 = vmatpush.msra.mxu0 %v217
    %1838 = vmatpush.msra.mxu0 %v213
    %1839 = vmatpush.msra.mxu0 %v209
    %1840 = vmatpush.msra.mxu0 %v205
    %1841 = vmatpush.msra.mxu0 %v201
    %1842 = vmatpush.msra.mxu0 %v197
    %1843 = vmatpush.msra.mxu0 %v193
    %1844 = vmatpush.msra.mxu0 %v189
    %1845 = vmatpush.msra.mxu0 %v185
    %1846 = vmatpush.msra.mxu0 %v181
    %1847 = vmatpush.msra.mxu0 %v177
    %1848 = vmatpush.msra.mxu0 %v173
    %1849 = vmatpush.msra.mxu0 %v169
    %1850 = vmatmul.f32.gmra.mxu0 %v1713
    %v1851 = vpop.f32.mrf.mxu0
    %v1852 = vadd.f32 %v1832, %v1851
    %1853 = vdwg.mxu0
    %1854 = vmatpush.msra.mxu0 %v166
    %1855 = vmatpush.msra.mxu0 %v162
    %1856 = vmatpush.msra.mxu0 %v158
    %1857 = vmatpush.msra.mxu0 %v154
    %1858 = vmatpush.msra.mxu0 %v150
    %1859 = vmatpush.msra.mxu0 %v146
    %1860 = vmatpush.msra.mxu0 %v142
    %1861 = vmatpush.msra.mxu0 %v138
    %1862 = vmatpush.msra.mxu0 %v134
    %1863 = vmatpush.msra.mxu0 %v130
    %1864 = vmatpush.msra.mxu0 %v126
    %1865 = vmatpush.msra.mxu0 %v122
    %1866 = vmatpush.msra.mxu0 %v118
    %1867 = vmatpush.msra.mxu0 %v114
    %1868 = vmatpush.msra.mxu0 %v110
    %1869 = vmatpush.msra.mxu0 %v106
    %1870 = vmatmul.f32.gmra.mxu0 %v1732
    %v1871 = vpop.f32.mrf.mxu0
    %v1872 = vadd.f32 %v258, %v1871
    %1873 = vdwg.mxu0
    %1874 = vmatpush.msra.mxu0 %v230
    %1875 = vmatpush.msra.mxu0 %v226
    %1876 = vmatpush.msra.mxu0 %v222
    %1877 = vmatpush.msra.mxu0 %v218
    %1878 = vmatpush.msra.mxu0 %v214
    %1879 = vmatpush.msra.mxu0 %v210
    %1880 = vmatpush.msra.mxu0 %v206
    %1881 = vmatpush.msra.mxu0 %v202
    %1882 = vmatpush.msra.mxu0 %v198
    %1883 = vmatpush.msra.mxu0 %v194
    %1884 = vmatpush.msra.mxu0 %v190
    %1885 = vmatpush.msra.mxu0 %v186
    %1886 = vmatpush.msra.mxu0 %v182
    %1887 = vmatpush.msra.mxu0 %v178
    %1888 = vmatpush.msra.mxu0 %v174
    %1889 = vmatpush.msra.mxu0 %v170
    %1890 = vmatmul.f32.gmra.mxu0 %v1713
    %v1891 = vpop.f32.mrf.mxu0
    %v1892 = vadd.f32 %v1872, %v1891
    %1893 = vdwg.mxu0
    %v1894 = vxor.u32 %v1772, 2147483648
    %v1895 = vmul.f32 %v1894, 1.442695
    %v1896 = vpow.pop %v1895
    %v1897 = vadd.f32 %v1896, 1.0
    %v1898 = vrcp.pop %v1897
    %v1899 = vmul.f32 %v1897, %v1898
    %v1900 = vsub.f32 1.0, %v1899
    %v1901 = vmul.f32 %v1898, %v1900
    %v1902 = vadd.f32 %v1898, %v1901
    %vm1903 = vweird.f32 %v1897
    %vm1904 = vweird.f32 %v1898
    %vm1905 = vmor %vm1903, %vm1904
    %v1906 = vsel %vm1905, %v1898, %v1902
    %v1907 = vand.u32 2147483647, %v1897
    %vm1908 = vcmp.eq.f32.partialorder %v1907, 8.507059e+37
    %v1909 = vand.u32 %v1897, 2147483648
    %v1910 = vor.u32 1.1754944e-38, %v1909
    %v1911 = vsel %vm1908, %v1910, %v1906
    %v1912 = vmul.f32 1.0, %v1911
    %v1913 = vxor.u32 %v1812, 2147483648
    %v1914 = vmul.f32 %v1913, 1.442695
    %v1915 = vpow.pop %v1914
    %v1916 = vadd.f32 %v1915, 1.0
    %v1917 = vrcp.pop %v1916
    %v1918 = vmul.f32 %v1916, %v1917
    %v1919 = vsub.f32 1.0, %v1918
    %v1920 = vmul.f32 %v1917, %v1919
    %v1921 = vadd.f32 %v1917, %v1920
    %vm1922 = vweird.f32 %v1916
    %vm1923 = vweird.f32 %v1917
    %vm1924 = vmor %vm1922, %vm1923
    %v1925 = vsel %vm1924, %v1917, %v1921
    %v1926 = vand.u32 2147483647, %v1916
    %vm1927 = vcmp.eq.f32.partialorder %v1926, 8.507059e+37
    %v1928 = vand.u32 %v1916, 2147483648
    %v1929 = vor.u32 1.1754944e-38, %v1928
    %v1930 = vsel %vm1927, %v1929, %v1925
    %v1931 = vmul.f32 1.0, %v1930
    %v1932 = vmul.f32 %v1912, %v1892
    %v1933 = vadd.f32 %v1852, %v1932
    %v1934 = vtanh.pop %v1933
    %v1935 = vsub.f32 1.0, %v1931
    %v1936 = vmul.f32 %v1935, %v1934
    %v1937 = vmul.f32 %v1931, %v1713
    %v1938 = vadd.f32 %v1936, %v1937
    %1939 = vmatpush.msra.mxu0 %v246
    %1940 = vmatpush.msra.mxu0 %v245
    %1941 = vmatpush.msra.mxu0 %v244
    %1942 = vmatpush.msra.mxu0 %v243
    %1943 = vmatpush.msra.mxu0 %v242
    %1944 = vmatpush.msra.mxu0 %v241
    %1945 = vmatpush.msra.mxu0 %v240
    %1946 = vmatpush.msra.mxu0 %v239
    %1947 = vmatpush.msra.mxu0 %v238
    %1948 = vmatpush.msra.mxu0 %v237
    %1949 = vmatpush.msra.mxu0 %v236
    %1950 = vmatpush.msra.mxu0 %v235
    %1951 = vmatpush.msra.mxu0 %v234
    %1952 = vmatpush.msra.mxu0 %v233
    %1953 = vmatpush.msra.mxu0 %v232
    %1954 = vmatpush.msra.mxu0 %v231
    %1955 = vmatmul.f32.gmra.mxu0 %v1938
    %v1956 = vpop.f32.mrf.mxu0
    %v1957 = vadd.f32 %v259, %v1956
    %1958 = vdwg.mxu0
    %1959 = vmatpush.msra.mxu0 %v163
    %1960 = vmatpush.msra.mxu0 %v159
    %1961 = vmatpush.msra.mxu0 %v155
    %1962 = vmatpush.msra.mxu0 %v151
    %1963 = vmatpush.msra.mxu0 %v147
    %1964 = vmatpush.msra.mxu0 %v143
    %1965 = vmatpush.msra.mxu0 %v139
    %1966 = vmatpush.msra.mxu0 %v135
    %1967 = vmatpush.msra.mxu0 %v131
    %1968 = vmatpush.msra.mxu0 %v127
    %1969 = vmatpush.msra.mxu0 %v123
    %1970 = vmatpush.msra.mxu0 %v119
    %1971 = vmatpush.msra.mxu0 %v115
    %1972 = vmatpush.msra.mxu0 %v111
    %1973 = vmatpush.msra.mxu0 %v107
    %1974 = vmatpush.msra.mxu0 %v103
    %1975 = vmatmul.f32.gmra.mxu0 %v1957
    %v1976 = vpop.f32.mrf.mxu0
    %v1977 = vadd.f32 %v255, %v1976
    %1978 = vdwg.mxu0
    %1979 = vmatpush.msra.mxu0 %v227
    %1980 = vmatpush.msra.mxu0 %v223
    %1981 = vmatpush.msra.mxu0 %v219
    %1982 = vmatpush.msra.mxu0 %v215
    %1983 = vmatpush.msra.mxu0 %v211
    %1984 = vmatpush.msra.mxu0 %v207
    %1985 = vmatpush.msra.mxu0 %v203
    %1986 = vmatpush.msra.mxu0 %v199
    %1987 = vmatpush.msra.mxu0 %v195
    %1988 = vmatpush.msra.mxu0 %v191
    %1989 = vmatpush.msra.mxu0 %v187
    %1990 = vmatpush.msra.mxu0 %v183
    %1991 = vmatpush.msra.mxu0 %v179
    %1992 = vmatpush.msra.mxu0 %v175
    %1993 = vmatpush.msra.mxu0 %v171
    %1994 = vmatpush.msra.mxu0 %v167
    %1995 = vmatmul.f32.gmra.mxu0 %v1938
    %v1996 = vpop.f32.mrf.mxu0
    %v1997 = vadd.f32 %v1977, %v1996
    %1998 = vdwg.mxu0
    %1999 = vmatpush.msra.mxu0 %v164
    %2000 = vmatpush.msra.mxu0 %v160
    %2001 = vmatpush.msra.mxu0 %v156
    %2002 = vmatpush.msra.mxu0 %v152
    %2003 = vmatpush.msra.mxu0 %v148
    %2004 = vmatpush.msra.mxu0 %v144
    %2005 = vmatpush.msra.mxu0 %v140
    %2006 = vmatpush.msra.mxu0 %v136
    %2007 = vmatpush.msra.mxu0 %v132
    %2008 = vmatpush.msra.mxu0 %v128
    %2009 = vmatpush.msra.mxu0 %v124
    %2010 = vmatpush.msra.mxu0 %v120
    %2011 = vmatpush.msra.mxu0 %v116
    %2012 = vmatpush.msra.mxu0 %v112
    %2013 = vmatpush.msra.mxu0 %v108
    %2014 = vmatpush.msra.mxu0 %v104
    %2015 = vmatmul.f32.gmra.mxu0 %v1957
    %v2016 = vpop.f32.mrf.mxu0
    %v2017 = vadd.f32 %v256, %v2016
    %2018 = vdwg.mxu0
    %2019 = vmatpush.msra.mxu0 %v228
    %2020 = vmatpush.msra.mxu0 %v224
    %2021 = vmatpush.msra.mxu0 %v220
    %2022 = vmatpush.msra.mxu0 %v216
    %2023 = vmatpush.msra.mxu0 %v212
    %2024 = vmatpush.msra.mxu0 %v208
    %2025 = vmatpush.msra.mxu0 %v204
    %2026 = vmatpush.msra.mxu0 %v200
    %2027 = vmatpush.msra.mxu0 %v196
    %2028 = vmatpush.msra.mxu0 %v192
    %2029 = vmatpush.msra.mxu0 %v188
    %2030 = vmatpush.msra.mxu0 %v184
    %2031 = vmatpush.msra.mxu0 %v180
    %2032 = vmatpush.msra.mxu0 %v176
    %2033 = vmatpush.msra.mxu0 %v172
    %2034 = vmatpush.msra.mxu0 %v168
    %2035 = vmatmul.f32.gmra.mxu0 %v1938
    %v2036 = vpop.f32.mrf.mxu0
    %v2037 = vadd.f32 %v2017, %v2036
    %2038 = vdwg.mxu0
    %2039 = vmatpush.msra.mxu0 %v165
    %2040 = vmatpush.msra.mxu0 %v161
    %2041 = vmatpush.msra.mxu0 %v157
    %2042 = vmatpush.msra.mxu0 %v153
    %2043 = vmatpush.msra.mxu0 %v149
    %2044 = vmatpush.msra.mxu0 %v145
    %2045 = vmatpush.msra.mxu0 %v141
    %2046 = vmatpush.msra.mxu0 %v137
    %2047 = vmatpush.msra.mxu0 %v133
    %2048 = vmatpush.msra.mxu0 %v129
    %2049 = vmatpush.msra.mxu0 %v125
    %2050 = vmatpush.msra.mxu0 %v121
    %2051 = vmatpush.msra.mxu0 %v117
    %2052 = vmatpush.msra.mxu0 %v113
    %2053 = vmatpush.msra.mxu0 %v109
    %2054 = vmatpush.msra.mxu0 %v105
    %2055 = vmatmul.f32.gmra.mxu0 %v1957
    %v2056 = vpop.f32.mrf.mxu0
    %v2057 = vadd.f32 %v257, %v2056
    %2058 = vdwg.mxu0
    %2059 = vmatpush.msra.mxu0 %v229
    %2060 = vmatpush.msra.mxu0 %v225
    %2061 = vmatpush.msra.mxu0 %v221
    %2062 = vmatpush.msra.mxu0 %v217
    %2063 = vmatpush.msra.mxu0 %v213
    %2064 = vmatpush.msra.mxu0 %v209
    %2065 = vmatpush.msra.mxu0 %v205
    %2066 = vmatpush.msra.mxu0 %v201
    %2067 = vmatpush.msra.mxu0 %v197
    %2068 = vmatpush.msra.mxu0 %v193
    %2069 = vmatpush.msra.mxu0 %v189
    %2070 = vmatpush.msra.mxu0 %v185
    %2071 = vmatpush.msra.mxu0 %v181
    %2072 = vmatpush.msra.mxu0 %v177
    %2073 = vmatpush.msra.mxu0 %v173
    %2074 = vmatpush.msra.mxu0 %v169
    %2075 = vmatmul.f32.gmra.mxu0 %v1938
    %v2076 = vpop.f32.mrf.mxu0
    %v2077 = vadd.f32 %v2057, %v2076
    %2078 = vdwg.mxu0
    %2079 = vmatpush.msra.mxu0 %v166
    %2080 = vmatpush.msra.mxu0 %v162
    %2081 = vmatpush.msra.mxu0 %v158
    %2082 = vmatpush.msra.mxu0 %v154
    %2083 = vmatpush.msra.mxu0 %v150
    %2084 = vmatpush.msra.mxu0 %v146
    %2085 = vmatpush.msra.mxu0 %v142
    %2086 = vmatpush.msra.mxu0 %v138
    %2087 = vmatpush.msra.mxu0 %v134
    %2088 = vmatpush.msra.mxu0 %v130
    %2089 = vmatpush.msra.mxu0 %v126
    %2090 = vmatpush.msra.mxu0 %v122
    %2091 = vmatpush.msra.mxu0 %v118
    %2092 = vmatpush.msra.mxu0 %v114
    %2093 = vmatpush.msra.mxu0 %v110
    %2094 = vmatpush.msra.mxu0 %v106
    %2095 = vmatmul.f32.gmra.mxu0 %v1957
    %v2096 = vpop.f32.mrf.mxu0
    %v2097 = vadd.f32 %v258, %v2096
    %2098 = vdwg.mxu0
    %2099 = vmatpush.msra.mxu0 %v230
    %2100 = vmatpush.msra.mxu0 %v226
    %2101 = vmatpush.msra.mxu0 %v222
    %2102 = vmatpush.msra.mxu0 %v218
    %2103 = vmatpush.msra.mxu0 %v214
    %2104 = vmatpush.msra.mxu0 %v210
    %2105 = vmatpush.msra.mxu0 %v206
    %2106 = vmatpush.msra.mxu0 %v202
    %2107 = vmatpush.msra.mxu0 %v198
    %2108 = vmatpush.msra.mxu0 %v194
    %2109 = vmatpush.msra.mxu0 %v190
    %2110 = vmatpush.msra.mxu0 %v186
    %2111 = vmatpush.msra.mxu0 %v182
    %2112 = vmatpush.msra.mxu0 %v178
    %2113 = vmatpush.msra.mxu0 %v174
    %2114 = vmatpush.msra.mxu0 %v170
    %2115 = vmatmul.f32.gmra.mxu0 %v1938
    %v2116 = vpop.f32.mrf.mxu0
    %v2117 = vadd.f32 %v2097, %v2116
    %2118 = vdwg.mxu0
    %v2119 = vxor.u32 %v1997, 2147483648
    %v2120 = vmul.f32 %v2119, 1.442695
    %v2121 = vpow.pop %v2120
    %v2122 = vadd.f32 %v2121, 1.0
    %v2123 = vrcp.pop %v2122
    %v2124 = vmul.f32 %v2122, %v2123
    %v2125 = vsub.f32 1.0, %v2124
    %v2126 = vmul.f32 %v2123, %v2125
    %v2127 = vadd.f32 %v2123, %v2126
    %vm2128 = vweird.f32 %v2122
    %vm2129 = vweird.f32 %v2123
    %vm2130 = vmor %vm2128, %vm2129
    %v2131 = vsel %vm2130, %v2123, %v2127
    %v2132 = vand.u32 2147483647, %v2122
    %vm2133 = vcmp.eq.f32.partialorder %v2132, 8.507059e+37
    %v2134 = vand.u32 %v2122, 2147483648
    %v2135 = vor.u32 1.1754944e-38, %v2134
    %v2136 = vsel %vm2133, %v2135, %v2131
    %v2137 = vmul.f32 1.0, %v2136
    %v2138 = vxor.u32 %v2037, 2147483648
    %v2139 = vmul.f32 %v2138, 1.442695
    %v2140 = vpow.pop %v2139
    %v2141 = vadd.f32 %v2140, 1.0
    %v2142 = vrcp.pop %v2141
    %v2143 = vmul.f32 %v2141, %v2142
    %v2144 = vsub.f32 1.0, %v2143
    %v2145 = vmul.f32 %v2142, %v2144
    %v2146 = vadd.f32 %v2142, %v2145
    %vm2147 = vweird.f32 %v2141
    %vm2148 = vweird.f32 %v2142
    %vm2149 = vmor %vm2147, %vm2148
    %v2150 = vsel %vm2149, %v2142, %v2146
    %v2151 = vand.u32 2147483647, %v2141
    %vm2152 = vcmp.eq.f32.partialorder %v2151, 8.507059e+37
    %v2153 = vand.u32 %v2141, 2147483648
    %v2154 = vor.u32 1.1754944e-38, %v2153
    %v2155 = vsel %vm2152, %v2154, %v2150
    %v2156 = vmul.f32 1.0, %v2155
    %v2157 = vmul.f32 %v2137, %v2117
    %v2158 = vadd.f32 %v2077, %v2157
    %v2159 = vtanh.pop %v2158
    %v2160 = vsub.f32 1.0, %v2156
    %v2161 = vmul.f32 %v2160, %v2159
    %v2162 = vmul.f32 %v2156, %v1938
    %v2163 = vadd.f32 %v2161, %v2162
    %2164 = vmatpush.msra.mxu0 %v246
    %2165 = vmatpush.msra.mxu0 %v245
    %2166 = vmatpush.msra.mxu0 %v244
    %2167 = vmatpush.msra.mxu0 %v243
    %2168 = vmatpush.msra.mxu0 %v242
    %2169 = vmatpush.msra.mxu0 %v241
    %2170 = vmatpush.msra.mxu0 %v240
    %2171 = vmatpush.msra.mxu0 %v239
    %2172 = vmatpush.msra.mxu0 %v238
    %2173 = vmatpush.msra.mxu0 %v237
    %2174 = vmatpush.msra.mxu0 %v236
    %2175 = vmatpush.msra.mxu0 %v235
    %2176 = vmatpush.msra.mxu0 %v234
    %2177 = vmatpush.msra.mxu0 %v233
    %2178 = vmatpush.msra.mxu0 %v232
    %2179 = vmatpush.msra.mxu0 %v231
    %2180 = vmatmul.f32.gmra.mxu0 %v2163
    %v2181 = vpop.f32.mrf.mxu0
    %v2182 = vadd.f32 %v259, %v2181
    %2183 = vdwg.mxu0
    %2184 = vst [vmem:[%s5] sm:$0xff] %v1507
    %2185 = vst [vmem:[%s5 + $0x8] sm:$0xff] %v1732
    %2186 = vst [vmem:[%s5 + $0x10] sm:$0xff] %v1957
    %2187 = vst [vmem:[%s5 + $0x18] sm:$0xff] %v2182
    // Predicated region
    $region30: #{seq2seq_forward.1} parent=1 // pred_check
      _
    $region31: #{seq2seq_forward.1} parent=1 // pred_check_branch
      %2189 = sbr.rel (0) target = $region33
    $region32: #{seq2seq_forward.1} parent=1 // pred_region
      _
    $region33: #{seq2seq_forward.1} parent=1 // pred_fallthru
      _
    // Predicated region
    $region34: #{seq2seq_forward.1} parent=1 // pred_check
      _
    $region35: #{seq2seq_forward.1} parent=1 // pred_check_branch
      %2191 = sbr.rel (0) target = $region37
    $region36: #{seq2seq_forward.1} parent=1 // pred_region
      _
    $region37: #{seq2seq_forward.1} parent=1 // pred_fallthru
      _
    %2192 = vsyncpa [#allocation3], 1
    %2193 = vsyncpa [#allocation5], 1

</llo_original>
